<compile_context>
chip_gen: v7x
topology: tpu7x:2x2x1
jax: 0.10.0
libtpu: 0.0.40
codegen_flags: <defaults>
</compile_context>

<pallas_src>
import functools
import math

import jax
import jax.numpy as jnp
from jax import lax
from jax.experimental import pallas as pl
from jax.experimental.pallas import tpu as pltpu


def _round_up(x, m):
    return (x + m - 1) // m * m


# --------------------- Pass 1: fused K / V projection ----------------------

def _kv_proj_kernel(x_ref, wkv_ref, k_ref, v_ref):
    """K,V for one (batch, row-block): one (block, Hp) @ (Hp, 2Hp) matmul."""
    hp = x_ref.shape[-1]
    kv = jnp.dot(x_ref[0], wkv_ref[...], preferred_element_type=jnp.float32)
    k_ref[0] = kv[:, :hp].astype(k_ref.dtype)   # lane-aligned (128-mult) slices
    v_ref[0] = kv[:, hp:].astype(v_ref.dtype)


# ------------- Pass 2: flash attention with fused Q projection -------------

def _flash_attn_kernel(x_q_ref, mask_ref, k_ref, v_ref, wq_ref,
                       o_ref, q_scr, m_scr, l_scr, acc_scr):
    kv_idx = pl.program_id(2)
    n_kv = pl.num_programs(2)

    @pl.when(kv_idx == 0)
    def _init():
        # Project Q once per query block; 1/sqrt(H) is pre-folded into Wq.
        q = jnp.dot(x_q_ref[0], wq_ref[...], preferred_element_type=jnp.float32)
        q_scr[...] = q.astype(q_scr.dtype)
        m_scr[...] = jnp.full(m_scr.shape, -jnp.inf, dtype=m_scr.dtype)
        l_scr[...] = jnp.zeros(l_scr.shape, dtype=l_scr.dtype)
        acc_scr[...] = jnp.zeros(acc_scr.shape, dtype=acc_scr.dtype)

    k = k_ref[0]                                   # (block_kv, Hp), bf16
    v = v_ref[0]                                   # (block_kv, Hp), bf16

    # scores = Q @ K^T, contracting last dims directly (no explicit transpose).
    s = lax.dot_general(q_scr[...], k,
                        dimension_numbers=(((1,), (1,)), ((), ())),
                        preferred_element_type=jnp.float32)   # (block_q, block_kv)

    # masked_fill(mask, -1e9); mask arrives as int8 (1 == masked).
    s = jnp.where(mask_ref[0].astype(jnp.float32) > 0.0, jnp.float32(-1e9), s)

    # Online softmax: accumulate unnormalized, normalize once at the end.
    m_prev = m_scr[...]
    m_new = jnp.maximum(m_prev, jnp.max(s, axis=-1, keepdims=True))
    corr = jnp.exp(m_prev - m_new)                 # (block_q, 1)
    p = jnp.exp(s - m_new)                         # (block_q, block_kv)
    l_scr[...] = corr * l_scr[...] + jnp.sum(p, axis=-1, keepdims=True)
    acc_scr[...] = corr * acc_scr[...] + jnp.dot(
        p.astype(v.dtype), v, preferred_element_type=jnp.float32)
    m_scr[...] = m_new

    @pl.when(kv_idx == n_kv - 1)
    def _finalize():
        inv_l = pl.reciprocal(l_scr[...], approx=True)   # EUP slot, ~free
        o_ref[0] = (acc_scr[...] * inv_l).astype(o_ref.dtype)


# --------------------------------- wrapper ---------------------------------

@functools.partial(jax.jit, static_argnames=("block_q", "block_kv", "compute_dtype"))
def attention_layer(inputs, mask, wq, wk, wv, *,
                    block_q=256, block_kv=256, compute_dtype=jnp.bfloat16):
    """inputs: (B, S, H); mask: (B, S, S) bool/num (nonzero == masked);
    wq/wk/wv: (H, H) in PyTorch Linear layout (out_dim, in_dim)."""
    B, S, H = inputs.shape
    out_dtype = inputs.dtype
    scale = 1.0 / (H ** 0.5)

    # 256-aligned tiles for v6e/v7x MXU, clamped so small S only pads to 128.
    block_q = min(block_q, _round_up(S, 128))
    block_kv = min(block_kv, _round_up(S, 128))
    s_pad = _round_up(S, (block_q * block_kv) // math.gcd(block_q, block_kv))
    h_pad = _round_up(H, 128)

    # Pad activations to lane-dense shapes; matmul operands in bf16
    # (accumulation stays f32 inside the kernels).
    x_p = jnp.zeros((B, s_pad, h_pad), compute_dtype)
    x_p = x_p.at[:, :S, :H].set(inputs.astype(compute_dtype))

    # int8 mask (1 == masked); padded key columns / padded rows are masked.
    mask_p = jnp.ones((B, s_pad, s_pad), jnp.int8)
    mask_p = mask_p.at[:, :S, :S].set(mask.astype(jnp.bool_).astype(jnp.int8))

    # PyTorch Linear stores (out, in); transpose so the kernels do x @ W.
    def _pad_w(w, s=1.0):
        wp = jnp.zeros((h_pad, h_pad), compute_dtype)
        return wp.at[:H, :H].set((w.T * s).astype(compute_dtype))

    wq_p = _pad_w(wq, scale)                                    # scale folded in
    wkv_p = jnp.concatenate([_pad_w(wk), _pad_w(wv)], axis=1)   # (Hp, 2*Hp)

    n_q = s_pad // block_q
    n_kv = s_pad // block_kv

    # ---- Pass 1: K/V projected exactly once per (batch, row-block). ----
    k_proj, v_proj = pl.pallas_call(
        _kv_proj_kernel,
        out_shape=(jax.ShapeDtypeStruct((B, s_pad, h_pad), compute_dtype),
                   jax.ShapeDtypeStruct((B, s_pad, h_pad), compute_dtype)),
        grid_spec=pltpu.PrefetchScalarGridSpec(
            num_scalar_prefetch=0,
            grid=(B, n_kv),
            in_specs=[
                pl.BlockSpec((1, block_kv, h_pad), lambda b, i: (b, i, 0)),   # x rows
                pl.BlockSpec((h_pad, 2 * h_pad), lambda b, i: (0, 0)),        # [Wk^T|Wv^T]
            ],
            out_specs=[
                pl.BlockSpec((1, block_kv, h_pad), lambda b, i: (b, i, 0)),   # K
                pl.BlockSpec((1, block_kv, h_pad), lambda b, i: (b, i, 0)),   # V
            ],
        ),
        compiler_params=pltpu.CompilerParams(
            dimension_semantics=("parallel", "parallel")),
    )(x_p, wkv_p)

    # ---- Pass 2: flash attention (online softmax), Q projection fused. ----
    out = pl.pallas_call(
        _flash_attn_kernel,
        out_shape=jax.ShapeDtypeStruct((B, s_pad, h_pad), out_dtype),
        grid_spec=pltpu.PrefetchScalarGridSpec(
            num_scalar_prefetch=0,
            grid=(B, n_q, n_kv),
            in_specs=[
                pl.BlockSpec((1, block_q, h_pad), lambda b, qi, ki: (b, qi, 0)),     # x (q rows)
                pl.BlockSpec((1, block_q, block_kv), lambda b, qi, ki: (b, qi, ki)), # mask tile
                pl.BlockSpec((1, block_kv, h_pad), lambda b, qi, ki: (b, ki, 0)),    # K tile
                pl.BlockSpec((1, block_kv, h_pad), lambda b, qi, ki: (b, ki, 0)),    # V tile
                pl.BlockSpec((h_pad, h_pad), lambda b, qi, ki: (0, 0)),              # Wq^T (scaled)
            ],
            out_specs=pl.BlockSpec((1, block_q, h_pad), lambda b, qi, ki: (b, qi, 0)),
            scratch_shapes=[
                pltpu.VMEM((block_q, h_pad), compute_dtype),   # cached Q tile
                pltpu.VMEM((block_q, 1), jnp.float32),         # running max
                pltpu.VMEM((block_q, 1), jnp.float32),         # running denom
                pltpu.VMEM((block_q, h_pad), jnp.float32),     # output accumulator
            ],
        ),
        compiler_params=pltpu.CompilerParams(
            dimension_semantics=("parallel", "parallel", "arbitrary")),
    )(x_p, mask_p, k_proj, v_proj, wq_p)

    return out[:, :S, :H]


def _reference(inputs, mask, wq, wk, wv):
    # Pure-JAX f32 reference mirroring the PyTorch forward.
    H = inputs.shape[-1]
    q = jnp.einsum("bsh,oh->bso", inputs, wq)
    k = jnp.einsum("bsh,oh->bso", inputs, wk)
    v = jnp.einsum("bsh,oh->bso", inputs, wv)
    alpha = jnp.einsum("bqo,bko->bqk", q, k) / (H ** 0.5)
    alpha = jnp.where(mask, -1e9, alpha)
    alpha = jax.nn.softmax(alpha, axis=-1)
    return jnp.einsum("bqk,bko->bqo", alpha, v)


if __name__ == "__main__":
    def _run_case(key, B, S, H, **kw):
        k_x, k_m, k_q, k_k, k_v = jax.random.split(key, 5)
        inputs = jax.random.normal(k_x, (B, S, H), dtype=jnp.float32)
        mask = jax.random.bernoulli(k_m, p=0.25, shape=(B, S, S))  # bool padding mask
        bound = 1.0 / (H ** 0.5)
        wq = jax.random.uniform(k_q, (H, H), jnp.float32, -bound, bound)
        wk = jax.random.uniform(k_k, (H, H), jnp.float32, -bound, bound)
        wv = jax.random.uniform(k_v, (H, H), jnp.float32, -bound, bound)

        out = jax.block_until_ready(attention_layer(inputs, mask, wq, wk, wv, **kw))
        ref = _reference(inputs, mask, wq, wk, wv)
        assert out.shape == (B, S, H)
        # bf16 matmul operands (f32 accumulation) -> tolerance loosened vs pure f32.
        assert jnp.allclose(out, ref, atol=2e-2, rtol=2e-2), \
            f"mismatch vs reference at B={B}, S={S}, H={H}"

    key = jax.random.PRNGKey(0)
    k1, k2 = jax.random.split(key)
    # Small shape implied by the module (single q/kv block after padding).
    _run_case(k1, B=2, S=8, H=32)
    # Multi-block case exercising the flash accumulation + K/V reuse path.
    _run_case(k2, B=2, S=300, H=64, block_q=128, block_kv=128)

    print("KERNEL_OK")
</pallas_src>

<mosaic_0001>
module attributes {stable_mosaic.version = 11 : i64} {
  func.func @_kv_proj_kernel(%arg0: i32, %arg1: i32, %arg2: memref<1x128x128xbf16, #tpu.memory_space<vmem>>, %arg3: memref<128x256xbf16, #tpu.memory_space<vmem>>, %arg4: memref<1x128x128xbf16, #tpu.memory_space<vmem>>, %arg5: memref<1x128x128xbf16, #tpu.memory_space<vmem>>) attributes {dimension_semantics = [#tpu.dimension_semantics<parallel>, #tpu.dimension_semantics<parallel>], iteration_bounds = array<i64: 2, 1>, scalar_prefetch = 0 : i64, scratch_operands = 0 : i64, tpu.core_type = #tpu.core_type<tc>, window_params = [{transform_indices = @transform_0, window_bounds = array<i64: 1, 128, 128>}, {pipeline_mode = #tpu.pipeline_mode<synchronous>, transform_indices = @transform_1, window_bounds = array<i64: 128, 256>}, {transform_indices = @transform_2, window_bounds = array<i64: 1, 128, 128>}, {transform_indices = @transform_3, window_bounds = array<i64: 1, 128, 128>}]} {
    %c0 = arith.constant 0 : index
    %c0_0 = arith.constant 0 : index
    %c0_1 = arith.constant 0 : index
    %0 = vector.load %arg2[%c0, %c0_0, %c0_1] : memref<1x128x128xbf16, #tpu.memory_space<vmem>>, vector<1x128x128xbf16>
    %1 = vector.shape_cast %0 : vector<1x128x128xbf16> to vector<128x128xbf16>
    %c0_2 = arith.constant 0 : index
    %c0_3 = arith.constant 0 : index
    %2 = vector.load %arg3[%c0_2, %c0_3] : memref<128x256xbf16, #tpu.memory_space<vmem>>, vector<128x256xbf16>
    %cst = arith.constant dense<0.000000e+00> : vector<128x256xf32>
    %3 = tpu.matmul %1, %2, %cst {dimension_numbers = #tpu.dot_dimension_numbers<[1], [0], [0], [1], [0, 0, 1, 1], [], []>} : vector<128x128xbf16>, vector<128x256xbf16>, vector<128x256xf32> -> vector<128x256xf32>
    %4 = vector.extract_strided_slice %3 {offsets = [0, 0], sizes = [128, 128], strides = [1, 1]} : vector<128x256xf32> to vector<128x128xf32>
    %5 = arith.truncf %4 : vector<128x128xf32> to vector<128x128xbf16>
    %c0_4 = arith.constant 0 : index
    %c0_5 = arith.constant 0 : index
    %c0_6 = arith.constant 0 : index
    %6 = vector.load %arg4[%c0_4, %c0_5, %c0_6] : memref<1x128x128xbf16, #tpu.memory_space<vmem>>, vector<1x128x128xbf16>
    %7 = vector.shape_cast %6 : vector<1x128x128xbf16> to vector<128x128xbf16>
    %8 = vector.shape_cast %5 : vector<128x128xbf16> to vector<1x128x128xbf16>
    tpu.vector_store %arg4[%c0_4, %c0_5, %c0_6], %8 {strides = array<i32>} : memref<1x128x128xbf16, #tpu.memory_space<vmem>>, vector<1x128x128xbf16>,
    %9 = vector.extract_strided_slice %3 {offsets = [0, 128], sizes = [128, 128], strides = [1, 1]} : vector<128x256xf32> to vector<128x128xf32>
    %10 = arith.truncf %9 : vector<128x128xf32> to vector<128x128xbf16>
    %c0_7 = arith.constant 0 : index
    %c0_8 = arith.constant 0 : index
    %c0_9 = arith.constant 0 : index
    %11 = vector.load %arg5[%c0_7, %c0_8, %c0_9] : memref<1x128x128xbf16, #tpu.memory_space<vmem>>, vector<1x128x128xbf16>
    %12 = vector.shape_cast %11 : vector<1x128x128xbf16> to vector<128x128xbf16>
    %13 = vector.shape_cast %10 : vector<128x128xbf16> to vector<1x128x128xbf16>
    tpu.vector_store %arg5[%c0_7, %c0_8, %c0_9], %13 {strides = array<i32>} : memref<1x128x128xbf16, #tpu.memory_space<vmem>>, vector<1x128x128xbf16>,
    return
  }
  func.func @transform_0(%arg0: i32, %arg1: i32) -> (i32, i32, i32) {
    %c0_i32 = arith.constant 0 : i32
    %c0_i32_0 = arith.constant 0 : i32
    return %arg0, %arg1, %c0_i32 : i32, i32, i32
  }
  func.func @transform_1(%arg0: i32, %arg1: i32) -> (i32, i32) {
    %c0_i32 = arith.constant 0 : i32
    %c0_i32_0 = arith.constant 0 : i32
    %c0_i32_1 = arith.constant 0 : i32
    return %c0_i32, %c0_i32_0 : i32, i32
  }
  func.func @transform_2(%arg0: i32, %arg1: i32) -> (i32, i32, i32) {
    %c0_i32 = arith.constant 0 : i32
    %c0_i32_0 = arith.constant 0 : i32
    return %arg0, %arg1, %c0_i32 : i32, i32, i32
  }
  func.func @transform_3(%arg0: i32, %arg1: i32) -> (i32, i32, i32) {
    %c0_i32 = arith.constant 0 : i32
    %c0_i32_0 = arith.constant 0 : i32
    return %arg0, %arg1, %c0_i32 : i32, i32, i32
  }
}

module attributes {stable_mosaic.version = 11 : i64} {
  func.func @_flash_attn_kernel(%arg0: i32, %arg1: i32, %arg2: i32, %arg3: memref<1x128x128xbf16, #tpu.memory_space<vmem>>, %arg4: memref<1x128x128xi8, #tpu.memory_space<vmem>>, %arg5: memref<1x128x128xbf16, #tpu.memory_space<vmem>>, %arg6: memref<1x128x128xbf16, #tpu.memory_space<vmem>>, %arg7: memref<128x128xbf16, #tpu.memory_space<vmem>>, %arg8: memref<1x128x128xf32, #tpu.memory_space<vmem>>, %arg9: memref<128x128xbf16, #tpu.memory_space<vmem>>, %arg10: memref<128x1xf32, #tpu.memory_space<vmem>>, %arg11: memref<128x1xf32, #tpu.memory_space<vmem>>, %arg12: memref<128x128xf32, #tpu.memory_space<vmem>>) attributes {dimension_semantics = [#tpu.dimension_semantics<parallel>, #tpu.dimension_semantics<parallel>, #tpu.dimension_semantics<arbitrary>], iteration_bounds = array<i64: 2, 1, 1>, scalar_prefetch = 0 : i64, scratch_operands = 4 : i64, tpu.core_type = #tpu.core_type<tc>, window_params = [{transform_indices = @transform_0, window_bounds = array<i64: 1, 128, 128>}, {transform_indices = @transform_1, window_bounds = array<i64: 1, 128, 128>}, {transform_indices = @transform_2, window_bounds = array<i64: 1, 128, 128>}, {transform_indices = @transform_3, window_bounds = array<i64: 1, 128, 128>}, {pipeline_mode = #tpu.pipeline_mode<synchronous>, transform_indices = @transform_4, window_bounds = array<i64: 128, 128>}, {transform_indices = @transform_5, window_bounds = array<i64: 1, 128, 128>}]} {
    %c0_i32 = arith.constant 0 : i32
    %0 = arith.cmpi eq, %arg2, %c0_i32 : i32
    %1 = arith.extui %0 : i1 to i32
    %c0_i32_0 = arith.constant 0 : i32
    %2 = arith.cmpi ne, %1, %c0_i32_0 : i32
    scf.if %2 {
      %c0_30 = arith.constant 0 : index
      %c0_31 = arith.constant 0 : index
      %c0_32 = arith.constant 0 : index
      %42 = vector.load %arg3[%c0_30, %c0_31, %c0_32] : memref<1x128x128xbf16, #tpu.memory_space<vmem>>, vector<1x128x128xbf16>
      %43 = vector.shape_cast %42 : vector<1x128x128xbf16> to vector<128x128xbf16>
      %c0_33 = arith.constant 0 : index
      %c0_34 = arith.constant 0 : index
      %44 = vector.load %arg7[%c0_33, %c0_34] : memref<128x128xbf16, #tpu.memory_space<vmem>>, vector<128x128xbf16>
      %cst_35 = arith.constant dense<0.000000e+00> : vector<128x128xf32>
      %45 = tpu.matmul %43, %44, %cst_35 {dimension_numbers = #tpu.dot_dimension_numbers<[1], [0], [0], [1], [0, 0, 1, 1], [], []>} : vector<128x128xbf16>, vector<128x128xbf16>, vector<128x128xf32> -> vector<128x128xf32>
      %46 = arith.truncf %45 : vector<128x128xf32> to vector<128x128xbf16>
      %c0_36 = arith.constant 0 : index
      %c0_37 = arith.constant 0 : index
      %47 = vector.load %arg9[%c0_36, %c0_37] : memref<128x128xbf16, #tpu.memory_space<vmem>>, vector<128x128xbf16>
      tpu.vector_store %arg9[%c0_36, %c0_37], %46 {strides = array<i32>} : memref<128x128xbf16, #tpu.memory_space<vmem>>, vector<128x128xbf16>,
      %cst_38 = arith.constant 0xFF800000 : f32
      %48 = vector.broadcast %cst_38 : f32 to vector<128x1xf32>
      %c0_39 = arith.constant 0 : index
      %c0_40 = arith.constant 0 : index
      %49 = vector.load %arg10[%c0_39, %c0_40] : memref<128x1xf32, #tpu.memory_space<vmem>>, vector<128x1xf32>
      tpu.vector_store %arg10[%c0_39, %c0_40], %48 {strides = array<i32>} : memref<128x1xf32, #tpu.memory_space<vmem>>, vector<128x1xf32>,
      %cst_41 = arith.constant 0.000000e+00 : f32
      %50 = vector.broadcast %cst_41 : f32 to vector<128x1xf32>
      %c0_42 = arith.constant 0 : index
      %c0_43 = arith.constant 0 : index
      %51 = vector.load %arg11[%c0_42, %c0_43] : memref<128x1xf32, #tpu.memory_space<vmem>>, vector<128x1xf32>
      tpu.vector_store %arg11[%c0_42, %c0_43], %50 {strides = array<i32>} : memref<128x1xf32, #tpu.memory_space<vmem>>, vector<128x1xf32>,
      %cst_44 = arith.constant 0.000000e+00 : f32
      %52 = vector.broadcast %cst_44 : f32 to vector<128x128xf32>
      %c0_45 = arith.constant 0 : index
      %c0_46 = arith.constant 0 : index
      %53 = vector.load %arg12[%c0_45, %c0_46] : memref<128x128xf32, #tpu.memory_space<vmem>>, vector<128x128xf32>
      tpu.vector_store %arg12[%c0_45, %c0_46], %52 {strides = array<i32>} : memref<128x128xf32, #tpu.memory_space<vmem>>, vector<128x128xf32>,
    } else {
    }
    %c0 = arith.constant 0 : index
    %c0_1 = arith.constant 0 : index
    %c0_2 = arith.constant 0 : index
    %3 = vector.load %arg5[%c0, %c0_1, %c0_2] : memref<1x128x128xbf16, #tpu.memory_space<vmem>>, vector<1x128x128xbf16>
    %4 = vector.shape_cast %3 : vector<1x128x128xbf16> to vector<128x128xbf16>
    %c0_3 = arith.constant 0 : index
    %c0_4 = arith.constant 0 : index
    %c0_5 = arith.constant 0 : index
    %5 = vector.load %arg6[%c0_3, %c0_4, %c0_5] : memref<1x128x128xbf16, #tpu.memory_space<vmem>>, vector<1x128x128xbf16>
    %6 = vector.shape_cast %5 : vector<1x128x128xbf16> to vector<128x128xbf16>
    %c0_6 = arith.constant 0 : index
    %c0_7 = arith.constant 0 : index
    %7 = vector.load %arg9[%c0_6, %c0_7] : memref<128x128xbf16, #tpu.memory_space<vmem>>, vector<128x128xbf16>
    %cst = arith.constant dense<0.000000e+00> : vector<128x128xf32>
    %8 = tpu.matmul %7, %4, %cst {dimension_numbers = #tpu.dot_dimension_numbers<[1], [1], [0], [0], [0, 0, 1, 0], [], []>} : vector<128x128xbf16>, vector<128x128xbf16>, vector<128x128xf32> -> vector<128x128xf32>
    %c0_8 = arith.constant 0 : index
    %c0_9 = arith.constant 0 : index
    %c0_10 = arith.constant 0 : index
    %9 = vector.load %arg4[%c0_8, %c0_9, %c0_10] : memref<1x128x128xi8, #tpu.memory_space<vmem>>, vector<1x128x128xi8>
    %10 = vector.shape_cast %9 : vector<1x128x128xi8> to vector<128x128xi8>
    %11 = arith.sitofp %10 : vector<128x128xi8> to vector<128x128xf32>
    %cst_11 = arith.constant 0.000000e+00 : f32
    %12 = vector.broadcast %cst_11 : f32 to vector<128x128xf32>
    %13 = arith.cmpf ogt, %11, %12 : vector<128x128xf32>
    %cst_12 = arith.constant -1.000000e+09 : f32
    %14 = vector.broadcast %cst_12 : f32 to vector<128x128xf32>
    %15 = arith.select %13, %14, %8 : vector<128x128xi1>, vector<128x128xf32>
    %c0_13 = arith.constant 0 : index
    %c0_14 = arith.constant 0 : index
    %16 = vector.load %arg10[%c0_13, %c0_14] : memref<128x1xf32, #tpu.memory_space<vmem>>, vector<128x1xf32>
    %cst_15 = arith.constant dense<0xFF800000> : vector<128xf32>
    %17 = vector.multi_reduction <maximumf>, %15, %cst_15 [1] : vector<128x128xf32> to vector<128xf32>
    %18 = vector.shape_cast %17 : vector<128xf32> to vector<128x1xf32>
    %19 = arith.maximumf %16, %18 : vector<128x1xf32>
    %20 = arith.subf %16, %19 : vector<128x1xf32>
    %21 = math.exp %20 : vector<128x1xf32>
    %22 = vector.broadcast %19 : vector<128x1xf32> to vector<128x128xf32>
    %23 = arith.subf %15, %22 : vector<128x128xf32>
    %24 = math.exp %23 : vector<128x128xf32>
    %c0_16 = arith.constant 0 : index
    %c0_17 = arith.constant 0 : index
    %25 = vector.load %arg11[%c0_16, %c0_17] : memref<128x1xf32, #tpu.memory_space<vmem>>, vector<128x1xf32>
    %26 = arith.mulf %21, %25 : vector<128x1xf32>
    %cst_18 = arith.constant dense<0.000000e+00> : vector<128xf32>
    %27 = vector.multi_reduction <add>, %24, %cst_18 [1] : vector<128x128xf32> to vector<128xf32>
    %28 = vector.shape_cast %27 : vector<128xf32> to vector<128x1xf32>
    %29 = arith.addf %26, %28 : vector<128x1xf32>
    %c0_19 = arith.constant 0 : index
    %c0_20 = arith.constant 0 : index
    %30 = vector.load %arg11[%c0_19, %c0_20] : memref<128x1xf32, #tpu.memory_space<vmem>>, vector<128x1xf32>
    tpu.vector_store %arg11[%c0_19, %c0_20], %29 {strides = array<i32>} : memref<128x1xf32, #tpu.memory_space<vmem>>, vector<128x1xf32>,
    %c0_21 = arith.constant 0 : index
    %c0_22 = arith.constant 0 : index
    %31 = vector.load %arg12[%c0_21, %c0_22] : memref<128x128xf32, #tpu.memory_space<vmem>>, vector<128x128xf32>
    %32 = vector.broadcast %21 : vector<128x1xf32> to vector<128x128xf32>
    %33 = arith.mulf %32, %31 : vector<128x128xf32>
    %34 = arith.truncf %24 : vector<128x128xf32> to vector<128x128xbf16>
    %cst_23 = arith.constant dense<0.000000e+00> : vector<128x128xf32>
    %35 = tpu.matmul %34, %6, %cst_23 {dimension_numbers = #tpu.dot_dimension_numbers<[1], [0], [0], [1], [0, 0, 1, 1], [], []>} : vector<128x128xbf16>, vector<128x128xbf16>, vector<128x128xf32> -> vector<128x128xf32>
    %36 = arith.addf %33, %35 : vector<128x128xf32>
    %c0_24 = arith.constant 0 : index
    %c0_25 = arith.constant 0 : index
    %37 = vector.load %arg12[%c0_24, %c0_25] : memref<128x128xf32, #tpu.memory_space<vmem>>, vector<128x128xf32>
    tpu.vector_store %arg12[%c0_24, %c0_25], %36 {strides = array<i32>} : memref<128x128xf32, #tpu.memory_space<vmem>>, vector<128x128xf32>,
    %c0_26 = arith.constant 0 : index
    %c0_27 = arith.constant 0 : index
    %38 = vector.load %arg10[%c0_26, %c0_27] : memref<128x1xf32, #tpu.memory_space<vmem>>, vector<128x1xf32>
    tpu.vector_store %arg10[%c0_26, %c0_27], %19 {strides = array<i32>} : memref<128x1xf32, #tpu.memory_space<vmem>>, vector<128x1xf32>,
    %c0_i32_28 = arith.constant 0 : i32
    %39 = arith.cmpi eq, %arg2, %c0_i32_28 : i32
    %40 = arith.extui %39 : i1 to i32
    %c0_i32_29 = arith.constant 0 : i32
    %41 = arith.cmpi ne, %40, %c0_i32_29 : i32
    scf.if %41 {
      %c0_30 = arith.constant 0 : index
      %c0_31 = arith.constant 0 : index
      %42 = vector.load %arg11[%c0_30, %c0_31] : memref<128x1xf32, #tpu.memory_space<vmem>>, vector<128x1xf32>
      %43 = tpu.reciprocal %42 {approx = true} : vector<128x1xf32> -> vector<128x1xf32>
      %c0_32 = arith.constant 0 : index
      %c0_33 = arith.constant 0 : index
      %44 = vector.load %arg12[%c0_32, %c0_33] : memref<128x128xf32, #tpu.memory_space<vmem>>, vector<128x128xf32>
      %45 = vector.broadcast %43 : vector<128x1xf32> to vector<128x128xf32>
      %46 = arith.mulf %44, %45 : vector<128x128xf32>
      %c0_34 = arith.constant 0 : index
      %c0_35 = arith.constant 0 : index
      %c0_36 = arith.constant 0 : index
      %47 = vector.load %arg8[%c0_34, %c0_35, %c0_36] : memref<1x128x128xf32, #tpu.memory_space<vmem>>, vector<1x128x128xf32>
      %48 = vector.shape_cast %47 : vector<1x128x128xf32> to vector<128x128xf32>
      %49 = vector.shape_cast %46 : vector<128x128xf32> to vector<1x128x128xf32>
      tpu.vector_store %arg8[%c0_34, %c0_35, %c0_36], %49 {strides = array<i32>} : memref<1x128x128xf32, #tpu.memory_space<vmem>>, vector<1x128x128xf32>,
    } else {
    }
    return
  }
  func.func @transform_0(%arg0: i32, %arg1: i32, %arg2: i32) -> (i32, i32, i32) {
    %c0_i32 = arith.constant 0 : i32
    %c0_i32_0 = arith.constant 0 : i32
    return %arg0, %arg1, %c0_i32 : i32, i32, i32
  }
  func.func @transform_1(%arg0: i32, %arg1: i32, %arg2: i32) -> (i32, i32, i32) {
    %c0_i32 = arith.constant 0 : i32
    return %arg0, %arg1, %arg2 : i32, i32, i32
  }
  func.func @transform_2(%arg0: i32, %arg1: i32, %arg2: i32) -> (i32, i32, i32) {
    %c0_i32 = arith.constant 0 : i32
    %c0_i32_0 = arith.constant 0 : i32
    return %arg0, %arg2, %c0_i32 : i32, i32, i32
  }
  func.func @transform_3(%arg0: i32, %arg1: i32, %arg2: i32) -> (i32, i32, i32) {
    %c0_i32 = arith.constant 0 : i32
    %c0_i32_0 = arith.constant 0 : i32
    return %arg0, %arg2, %c0_i32 : i32, i32, i32
  }
  func.func @transform_4(%arg0: i32, %arg1: i32, %arg2: i32) -> (i32, i32) {
    %c0_i32 = arith.constant 0 : i32
    %c0_i32_0 = arith.constant 0 : i32
    %c0_i32_1 = arith.constant 0 : i32
    return %c0_i32, %c0_i32_0 : i32, i32
  }
  func.func @transform_5(%arg0: i32, %arg1: i32, %arg2: i32) -> (i32, i32, i32) {
    %c0_i32 = arith.constant 0 : i32
    %c0_i32_0 = arith.constant 0 : i32
    return %arg0, %arg1, %c0_i32 : i32, i32, i32
  }
}

</mosaic_0001>

<llo_original>
// kernel: attention_layer.2
$region0: #{attention_layer.2}
  #allocation0 [shape = 'u32[]', space=smem, size = 0x4, offset = 0x4, fixed_abs, tag = 'smem constant byte address 0x4 - core index']
  #allocation1 [shape = 'u32[144,128]{1,0:T(1,128)}', space=vmem, size = 0x12000, scoped, tag = 'internal scratch']
  %s0 = inlined_call_operand.vmem [shape: bf16[2,128,128], index: 0, kind: input, shape index: {}]
  %s1 = inlined_call_operand.vmem [shape: bf16[128,256], index: 1, kind: input, shape index: {}]
  %s2 = inlined_call_operand.vmem [shape: bf16[2,128,128], index: 2, kind: output, shape index: {0}]
  %s3 = inlined_call_operand.vmem [shape: bf16[2,128,128], index: 3, kind: output, shape index: {1}]
  %4 = xla_tuple %s2, %s3
  %s5 = sld [smem:[#allocation0]]
  $region49: #{attention_layer.2} parent=0
    _
  %s7 = ssub.s32 1, %s5
  %s8 = scalar_select 0, %s7, %s5
  loop: start=0, step=1, limit=4
  $region2: #{attention_layer.2} parent=0 // loop_pre_header
    _
  $region3: #{attention_layer.2} parent=0 // loop_header
    %s10 = sphi 0, %s14
    %p11 = scmp.ge.s32.totalorder %s10, 4
    %s17 = sphi 0, %s29
    %s18 = sphi 0, %s25
    %s19 = sphi 0, %s17
    %s20 = sphi 0, %s18
    %s21 = sphi 0, %s19
    %s22 = sphi 0, %s20
    %s34 = sphi 0, %s36
    %s37 = sphi 0, %s34
    %s38 = sphi 0, %s37
    %s54 = sphi 0, %s38
    %s58 = sphi 0, %s58
    %s60 = sphi 0, %s58
    %s61 = sphi 0, %s60
    %s75 = sphi 0, %s61
    %s83 = sphi 0, %s85
    %s86 = sphi 0, %s83
    %s87 = sphi 0, %s86
    %s103 = sphi 0, %s87
    %s111 = sphi 0, %s113
    %s114 = sphi 0, %s111
    %s115 = sphi 0, %s114
    %s131 = sphi 0, %s115
  $region4: #{attention_layer.2} parent=0 // loop_header_branch
    %13 = sbr.rel (%p11) target = $region8
  $region5: #{attention_layer.2} parent=0 // loop_body
    %s15 = ssub.s32 %s10, 1
    %s16 = ssub.s32 %s10, 2
    %s23 = sadd.s32 1, %s18
    %p24 = scmp.ge.s32.totalorder %s23, 1
    %s25 = scalar_select %p24, 0, %s23
    %s26 = sadd.s32 1, %s17
    %s27 = scalar_select %p24, %s26, %s17
    %p28 = scmp.ge.s32.totalorder %s27, 2
    %s29 = scalar_select %p28, 0, %s27
    %s30 = ssub.s32 %s17, %s29
    %s31 = ssub.s32 %s18, %s25
    %s32 = sor.u32 %s30, %s31
    %p33 = scmp.eq.s32.totalorder %s32, 0
    %s35 = sadd.s32 %s34, 1
    %s36 = scalar_select %p33, %s34, %s35
    %p39 = pneg %p33
    %p40 = scmp.eq.s32.totalorder %s10, 1
    %p41 = por %p39, %p40
    %p42 = scmp.ne.s32.totalorder %s34, %s37
    %p43 = scmp.eq.s32.totalorder %s10, 0
    %p44 = por %p42, %p43
    %p45 = scmp.ne.s32.totalorder %s34, %s37
    %p46 = scmp.eq.s32.totalorder %s15, 1
    %p47 = por %p45, %p46
    %p48 = scmp.ne.s32.totalorder %s37, %s38
    %p49 = scmp.eq.s32.totalorder %s15, 0
    %p50 = por %p48, %p49
    %p51 = scmp.ne.s32.totalorder %s37, %s38
    %p52 = scmp.eq.s32.totalorder %s16, 1
    %p53 = por %p51, %p52
    %p55 = scmp.ne.s32.totalorder %s38, %s54
    %p56 = scmp.eq.s32.totalorder %s16, 0
    %p57 = por %p55, %p56
    %s59 = sadd.s32 %s58, 1
    %p62 = scmp.eq.s32.totalorder %s10, 1
    %p63 = scmp.ne.s32.totalorder %s58, %s60
    %p64 = scmp.eq.s32.totalorder %s10, 0
    %p65 = por %p63, %p64
    %p66 = scmp.ne.s32.totalorder %s58, %s60
    %p67 = scmp.eq.s32.totalorder %s15, 1
    %p68 = por %p66, %p67
    %p69 = scmp.ne.s32.totalorder %s60, %s61
    %p70 = scmp.eq.s32.totalorder %s15, 0
    %p71 = por %p69, %p70
    %p72 = scmp.ne.s32.totalorder %s60, %s61
    %p73 = scmp.eq.s32.totalorder %s16, 1
    %p74 = por %p72, %p73
    %p76 = scmp.ne.s32.totalorder %s61, %s75
    %p77 = scmp.eq.s32.totalorder %s16, 0
    %p78 = por %p76, %p77
    %s79 = ssub.s32 %s17, %s29
    %s80 = ssub.s32 %s18, %s25
    %s81 = sor.u32 %s79, %s80
    %p82 = scmp.eq.s32.totalorder %s81, 0
    %s84 = sadd.s32 %s83, 1
    %s85 = scalar_select %p82, %s83, %s84
    %p88 = pneg %p82
    %p89 = scmp.eq.s32.totalorder %s10, 1
    %p90 = por %p88, %p89
    %p91 = scmp.ne.s32.totalorder %s83, %s86
    %p92 = scmp.eq.s32.totalorder %s10, 0
    %p93 = por %p91, %p92
    %p94 = scmp.ne.s32.totalorder %s83, %s86
    %p95 = scmp.eq.s32.totalorder %s15, 1
    %p96 = por %p94, %p95
    %p97 = scmp.ne.s32.totalorder %s86, %s87
    %p98 = scmp.eq.s32.totalorder %s15, 0
    %p99 = por %p97, %p98
    %p100 = scmp.ne.s32.totalorder %s86, %s87
    %p101 = scmp.eq.s32.totalorder %s16, 1
    %p102 = por %p100, %p101
    %p104 = scmp.ne.s32.totalorder %s87, %s103
    %p105 = scmp.eq.s32.totalorder %s16, 0
    %p106 = por %p104, %p105
    %s107 = ssub.s32 %s17, %s29
    %s108 = ssub.s32 %s18, %s25
    %s109 = sor.u32 %s107, %s108
    %p110 = scmp.eq.s32.totalorder %s109, 0
    %s112 = sadd.s32 %s111, 1
    %s113 = scalar_select %p110, %s111, %s112
    %p116 = pneg %p110
    %p117 = scmp.eq.s32.totalorder %s10, 1
    %p118 = por %p116, %p117
    %p119 = scmp.ne.s32.totalorder %s111, %s114
    %p120 = scmp.eq.s32.totalorder %s10, 0
    %p121 = por %p119, %p120
    %p122 = scmp.ne.s32.totalorder %s111, %s114
    %p123 = scmp.eq.s32.totalorder %s15, 1
    %p124 = por %p122, %p123
    %p125 = scmp.ne.s32.totalorder %s114, %s115
    %p126 = scmp.eq.s32.totalorder %s15, 0
    %p127 = por %p125, %p126
    %p128 = scmp.ne.s32.totalorder %s114, %s115
    %p129 = scmp.eq.s32.totalorder %s16, 1
    %p130 = por %p128, %p129
    %p132 = scmp.ne.s32.totalorder %s115, %s131
    %p133 = scmp.eq.s32.totalorder %s16, 0
    %p134 = por %p132, %p133
    %p135 = scmp.le.s32.totalorder 1, %s10
    %p136 = scmp.lt.s32.totalorder %s10, 3
    %p137 = pnand %p135, %p136
    %p138 = pneg %p137
    // Predicated region
    $region9: #{attention_layer.2} parent=5 // pred_check
      _
    $region10: #{attention_layer.2} parent=5 // pred_check_branch
      %140 = sbr.rel (%p137) target = $region12
    $region11: #{attention_layer.2} parent=5 // pred_region
      %s141 = ssub.s32 %s10, 1
      // Predicated region
      $region13: #{attention_layer.2} parent=11 // pred_check
        %p142 = pneg %p71
      $region14: #{attention_layer.2} parent=11 // pred_check_branch
        %144 = sbr.rel (%p142) target = $region16
      $region15: #{attention_layer.2} parent=11 // pred_region
        _
      $region16: #{attention_layer.2} parent=11 // pred_fallthru
        _
    $region12: #{attention_layer.2} parent=5 // pred_fallthru
      _
    %p145 = scmp.lt.s32.totalorder %s10, 2
    // Predicated region
    $region17: #{attention_layer.2} parent=5 // pred_check
      %p146 = pneg %p145
    $region18: #{attention_layer.2} parent=5 // pred_check_branch
      %148 = sbr.rel (%p146) target = $region20
    $region19: #{attention_layer.2} parent=5 // pred_region
      // Predicated region
      $region21: #{attention_layer.2} parent=19 // pred_check
        %p149 = pneg %p44
      $region22: #{attention_layer.2} parent=19 // pred_check_branch
        %151 = sbr.rel (%p149) target = $region24
      $region23: #{attention_layer.2} parent=19 // pred_region
        %s152 = smul.u32 16, %s18
        %p153 = scmp.lt.s32.totalorder %s17, 1
        %s154 = scalar_select %p153, %s17, 1
        %p155 = scmp.lt.s32.totalorder %s152, 15
        %s156 = scalar_select %p155, %s152, 15
        %s157 = smul.addr %s154, 16
        %s158 = sadd.s32 %s156, %s157
        %s159 = smul.addr %s158, 4
        %s160 = scalar_lea.vmem %s0, %s159
        %s161 = smul.u32 16, %s18
      $region24: #{attention_layer.2} parent=19 // pred_fallthru
        _
    $region20: #{attention_layer.2} parent=5 // pred_fallthru
      _
    %p162 = scmp.le.s32.totalorder 1, %s10
    %p163 = scmp.lt.s32.totalorder %s10, 3
    %p164 = pnand %p162, %p163
    %p165 = pneg %p164
    // Predicated region
    $region25: #{attention_layer.2} parent=5 // pred_check
      _
    $region26: #{attention_layer.2} parent=5 // pred_check_branch
      %167 = sbr.rel (%p164) target = $region28
    $region27: #{attention_layer.2} parent=5 // pred_region
      %s168 = ssub.s32 %s10, 1
      %s169 = smul.u32 16, %s20
      %p170 = scmp.lt.s32.totalorder %s19, 1
      %s171 = scalar_select %p170, %s19, 1
      %p172 = scmp.lt.s32.totalorder %s169, 15
      %s173 = scalar_select %p172, %s169, 15
      %s174 = smul.addr %s171, 16
      %s175 = sadd.s32 %s173, %s174
      %s176 = smul.addr %s175, 4
      %s177 = scalar_lea.vmem %s0, %s176
      %p178 = pneg %p50
      %p179 = pneg %p47
      %p180 = pneg %p71
      %p181 = pneg %p68
      %p182 = pneg %p99
      %p183 = pneg %p96
      %s184 = smul.u32 16, %s20
      %p185 = scmp.lt.s32.totalorder %s19, 1
      %s186 = scalar_select %p185, %s19, 1
      %p187 = scmp.lt.s32.totalorder %s184, 15
      %s188 = scalar_select %p187, %s184, 15
      %s189 = smul.addr %s186, 16
      %s190 = sadd.s32 %s188, %s189
      %s191 = smul.addr %s190, 4
      %s192 = scalar_lea.vmem %s2, %s191
      %p193 = pneg %p127
      %p194 = pneg %p124
      %s195 = smul.u32 16, %s20
      %p196 = scmp.lt.s32.totalorder %s19, 1
      %s197 = scalar_select %p196, %s19, 1
      %p198 = scmp.lt.s32.totalorder %s195, 15
      %s199 = scalar_select %p198, %s195, 15
      %s200 = smul.addr %s197, 16
      %s201 = sadd.s32 %s199, %s200
      %s202 = smul.addr %s201, 4
      %s203 = scalar_lea.vmem %s3, %s202
      %s204 = smul.u32 16, %s20
      %p205 = scmp.lt.s32.totalorder %s19, 1
      %s206 = scalar_select %p205, %s19, 1
      %p207 = scmp.lt.s32.totalorder %s204, 15
      %s208 = scalar_select %p207, %s204, 15
      %s209 = smul.addr %s206, 16
      %s210 = sadd.s32 %s208, %s209
      %s211 = smul.addr %s210, 4
      %s212 = scalar_lea.vmem %s0, %s211
      %s213 = smul.u32 16, %s20
      %s214 = smul.u32 16, %s20
      %p215 = scmp.lt.s32.totalorder %s19, 1
      %s216 = scalar_select %p215, %s19, 1
      %p217 = scmp.lt.s32.totalorder %s214, 15
      %s218 = scalar_select %p217, %s214, 15
      %s219 = smul.addr %s216, 16
      %s220 = sadd.s32 %s218, %s219
      %s221 = smul.addr %s220, 4
      %s222 = scalar_lea.vmem %s2, %s221
      %s223 = smul.u32 16, %s20
      %s224 = smul.u32 16, %s20
      %p225 = scmp.lt.s32.totalorder %s19, 1
      %s226 = scalar_select %p225, %s19, 1
      %p227 = scmp.lt.s32.totalorder %s224, 15
      %s228 = scalar_select %p227, %s224, 15
      %s229 = smul.addr %s226, 16
      %s230 = sadd.s32 %s228, %s229
      %s231 = smul.addr %s230, 4
      %s232 = scalar_lea.vmem %s3, %s231
      %s233 = smul.u32 16, %s20
      %v235 = vld [vmem:[%s212] sm:$0xf]
      %v236 = vld [vmem:[%s212 + $0x4] sm:$0xf]
      %v237 = vld [vmem:[%s212 + $0x8] sm:$0xf]
      %v238 = vld [vmem:[%s212 + $0xc] sm:$0xf]
      %v239 = vld [vmem:[%s212 + $0x10] sm:$0xf]
      %v240 = vld [vmem:[%s212 + $0x14] sm:$0xf]
      %v241 = vld [vmem:[%s212 + $0x18] sm:$0xf]
      %v242 = vld [vmem:[%s212 + $0x1c] sm:$0xf]
      %v243 = vld [vmem:[%s212 + $0x20] sm:$0xf]
      %v244 = vld [vmem:[%s212 + $0x24] sm:$0xf]
      %v245 = vld [vmem:[%s212 + $0x28] sm:$0xf]
      %v246 = vld [vmem:[%s212 + $0x2c] sm:$0xf]
      %v247 = vld [vmem:[%s212 + $0x30] sm:$0xf]
      %v248 = vld [vmem:[%s212 + $0x34] sm:$0xf]
      %v249 = vld [vmem:[%s212 + $0x38] sm:$0xf]
      %v250 = vld [vmem:[%s212 + $0x3c] sm:$0xf]
      %v251 = vld [vmem:[%s1] sm:$0xff]
      %v252 = vld [vmem:[%s1 + $0x8] sm:$0xff]
      %v253 = vld [vmem:[%s1 + $0x10] sm:$0xff]
      %v254 = vld [vmem:[%s1 + $0x18] sm:$0xff]
      %v255 = vld [vmem:[%s1 + $0x20] sm:$0xff]
      %v256 = vld [vmem:[%s1 + $0x28] sm:$0xff]
      %v257 = vld [vmem:[%s1 + $0x30] sm:$0xff]
      %v258 = vld [vmem:[%s1 + $0x38] sm:$0xff]
      %v259 = vld [vmem:[%s1 + $0x40] sm:$0xff]
      %v260 = vld [vmem:[%s1 + $0x48] sm:$0xff]
      %v261 = vld [vmem:[%s1 + $0x50] sm:$0xff]
      %v262 = vld [vmem:[%s1 + $0x58] sm:$0xff]
      %v263 = vld [vmem:[%s1 + $0x60] sm:$0xff]
      %v264 = vld [vmem:[%s1 + $0x68] sm:$0xff]
      %v265 = vld [vmem:[%s1 + $0x70] sm:$0xff]
      %v266 = vld [vmem:[%s1 + $0x78] sm:$0xff]
      %v283 = vunpack.c.l.b16 %v235
      %v284 = vunpack.c.l.b16 %v236
      %v285 = vunpack.c.l.b16 %v237
      %v286 = vunpack.c.l.b16 %v238
      %v287 = vunpack.c.l.b16 %v239
      %v288 = vunpack.c.l.b16 %v240
      %v289 = vunpack.c.l.b16 %v241
      %v290 = vunpack.c.l.b16 %v242
      %v291 = vunpack.c.l.b16 %v243
      %v292 = vunpack.c.l.b16 %v244
      %v293 = vunpack.c.l.b16 %v245
      %v294 = vunpack.c.l.b16 %v246
      %v295 = vunpack.c.l.b16 %v247
      %v296 = vunpack.c.l.b16 %v248
      %v297 = vunpack.c.l.b16 %v249
      %v298 = vunpack.c.l.b16 %v250
      %v299 = vpack.c.b16 %v284, %v283
      %v300 = vpack.c.b16 %v286, %v285
      %v301 = vpack.c.b16 %v288, %v287
      %v302 = vpack.c.b16 %v290, %v289
      %v303 = vpack.c.b16 %v292, %v291
      %v304 = vpack.c.b16 %v294, %v293
      %v305 = vpack.c.b16 %v296, %v295
      %v306 = vpack.c.b16 %v298, %v297
      %v331 = vunpack.c.l.b16 %v251
      %v332 = vunpack.c.h.b16 %v251
      %v333 = vunpack.c.l.b16 %v252
      %v334 = vunpack.c.h.b16 %v252
      %v335 = vunpack.c.l.b16 %v253
      %v336 = vunpack.c.h.b16 %v253
      %v337 = vunpack.c.l.b16 %v254
      %v338 = vunpack.c.h.b16 %v254
      %v339 = vunpack.c.l.b16 %v255
      %v340 = vunpack.c.h.b16 %v255
      %v341 = vunpack.c.l.b16 %v256
      %v342 = vunpack.c.h.b16 %v256
      %v343 = vunpack.c.l.b16 %v257
      %v344 = vunpack.c.h.b16 %v257
      %v345 = vunpack.c.l.b16 %v258
      %v346 = vunpack.c.h.b16 %v258
      %v347 = vunpack.c.l.b16 %v259
      %v348 = vunpack.c.h.b16 %v259
      %v349 = vunpack.c.l.b16 %v260
      %v350 = vunpack.c.h.b16 %v260
      %v351 = vunpack.c.l.b16 %v261
      %v352 = vunpack.c.h.b16 %v261
      %v353 = vunpack.c.l.b16 %v262
      %v354 = vunpack.c.h.b16 %v262
      %v355 = vunpack.c.l.b16 %v263
      %v356 = vunpack.c.h.b16 %v263
      %v357 = vunpack.c.l.b16 %v264
      %v358 = vunpack.c.h.b16 %v264
      %v359 = vunpack.c.l.b16 %v265
      %v360 = vunpack.c.h.b16 %v265
      %v361 = vunpack.c.l.b16 %v266
      %v362 = vunpack.c.h.b16 %v266
      %v363 = vpack.c.b16 %v333, %v331
      %v364 = vpack.c.b16 %v334, %v332
      %v365 = vpack.c.b16 %v337, %v335
      %v366 = vpack.c.b16 %v338, %v336
      %v367 = vpack.c.b16 %v341, %v339
      %v368 = vpack.c.b16 %v342, %v340
      %v369 = vpack.c.b16 %v345, %v343
      %v370 = vpack.c.b16 %v346, %v344
      %v371 = vpack.c.b16 %v349, %v347
      %v372 = vpack.c.b16 %v350, %v348
      %v373 = vpack.c.b16 %v353, %v351
      %v374 = vpack.c.b16 %v354, %v352
      %v375 = vpack.c.b16 %v357, %v355
      %v376 = vpack.c.b16 %v358, %v356
      %v377 = vpack.c.b16 %v361, %v359
      %v378 = vpack.c.b16 %v362, %v360
      %395 = vmatprep.subr.bf16.mxu0 %v364
      %396 = vmatpush1.bf16.msra.mxu0 %v363
      %397 = vmatprep.subr.bf16.mxu0 %v366
      %398 = vmatpush1.bf16.msra.mxu0 %v365
      %399 = vmatprep.subr.bf16.mxu0 %v368
      %400 = vmatpush1.bf16.msra.mxu0 %v367
      %401 = vmatprep.subr.bf16.mxu0 %v370
      %402 = vmatpush1.bf16.msra.mxu0 %v369
      %403 = vmatprep.subr.bf16.mxu0 %v372
      %404 = vmatpush1.bf16.msra.mxu0 %v371
      %405 = vmatprep.subr.bf16.mxu0 %v374
      %406 = vmatpush1.bf16.msra.mxu0 %v373
      %407 = vmatprep.subr.bf16.mxu0 %v376
      %408 = vmatpush1.bf16.msra.mxu0 %v375
      %409 = vmatprep.subr.bf16.mxu0 %v378
      %410 = vmatpush1.bf16.msra.mxu0 %v377
      %411 = vmatprep.subr.bf16.mxu0 0
      %412 = vmatpush1.bf16.msra.mxu0 0
      %413 = vmatprep.subr.bf16.mxu0 0
      %414 = vmatpush1.bf16.msra.mxu0 0
      %415 = vmatprep.subr.bf16.mxu0 0
      %416 = vmatpush1.bf16.msra.mxu0 0
      %417 = vmatprep.subr.bf16.mxu0 0
      %418 = vmatpush1.bf16.msra.mxu0 0
      %419 = vmatprep.subr.bf16.mxu0 0
      %420 = vmatpush1.bf16.msra.mxu0 0
      %421 = vmatprep.subr.bf16.mxu0 0
      %422 = vmatpush1.bf16.msra.mxu0 0
      %423 = vmatprep.subr.bf16.mxu0 0
      %424 = vmatpush1.bf16.msra.mxu0 0
      %425 = vmatprep.subr.bf16.mxu0 0
      %426 = vmatpush1.bf16.msra.mxu0 0
      %427 = vmatprep.mubr.bf16.mxu0 0
      %428 = vmatmul.mubr.bf16.gmra.mrb[0].mxu0 %v299
      %v429 = vpop.f32.mrb[0].mxu0
      %v430 = vadd.f32 0.0, %v429
      %v431 = vpop.f32.mrb[0].mxu0
      %v432 = vadd.f32 0.0, %v431
      %v433 = vpop.f32.mrb[0].mxu0
      %v434 = vadd.f32 0.0, %v433
      %v435 = vpop.f32.mrb[0].mxu0
      %v436 = vadd.f32 0.0, %v435
      %437 = vmatprep.mubr.bf16.mxu0 0
      %438 = vmatmul.mubr.bf16.gmra.mrb[0].mxu0 %v300
      %v439 = vpop.f32.mrb[0].mxu0
      %v440 = vadd.f32 0.0, %v439
      %v441 = vpop.f32.mrb[0].mxu0
      %v442 = vadd.f32 0.0, %v441
      %v443 = vpop.f32.mrb[0].mxu0
      %v444 = vadd.f32 0.0, %v443
      %v445 = vpop.f32.mrb[0].mxu0
      %v446 = vadd.f32 0.0, %v445
      %447 = vmatprep.mubr.bf16.mxu0 0
      %448 = vmatmul.mubr.bf16.gmra.mrb[0].mxu0 %v301
      %v449 = vpop.f32.mrb[0].mxu0
      %v450 = vadd.f32 0.0, %v449
      %v451 = vpop.f32.mrb[0].mxu0
      %v452 = vadd.f32 0.0, %v451
      %v453 = vpop.f32.mrb[0].mxu0
      %v454 = vadd.f32 0.0, %v453
      %v455 = vpop.f32.mrb[0].mxu0
      %v456 = vadd.f32 0.0, %v455
      %457 = vmatprep.mubr.bf16.mxu0 0
      %458 = vmatmul.mubr.bf16.gmra.mrb[0].mxu0 %v302
      %v459 = vpop.f32.mrb[0].mxu0
      %v460 = vadd.f32 0.0, %v459
      %v461 = vpop.f32.mrb[0].mxu0
      %v462 = vadd.f32 0.0, %v461
      %v463 = vpop.f32.mrb[0].mxu0
      %v464 = vadd.f32 0.0, %v463
      %v465 = vpop.f32.mrb[0].mxu0
      %v466 = vadd.f32 0.0, %v465
      %467 = vmatprep.mubr.bf16.mxu0 0
      %468 = vmatmul.mubr.bf16.gmra.mrb[0].mxu0 %v303
      %v469 = vpop.f32.mrb[0].mxu0
      %v470 = vadd.f32 0.0, %v469
      %v471 = vpop.f32.mrb[0].mxu0
      %v472 = vadd.f32 0.0, %v471
      %v473 = vpop.f32.mrb[0].mxu0
      %v474 = vadd.f32 0.0, %v473
      %v475 = vpop.f32.mrb[0].mxu0
      %v476 = vadd.f32 0.0, %v475
      %477 = vmatprep.mubr.bf16.mxu0 0
      %478 = vmatmul.mubr.bf16.gmra.mrb[0].mxu0 %v304
      %v479 = vpop.f32.mrb[0].mxu0
      %v480 = vadd.f32 0.0, %v479
      %v481 = vpop.f32.mrb[0].mxu0
      %v482 = vadd.f32 0.0, %v481
      %v483 = vpop.f32.mrb[0].mxu0
      %v484 = vadd.f32 0.0, %v483
      %v485 = vpop.f32.mrb[0].mxu0
      %v486 = vadd.f32 0.0, %v485
      %487 = vmatprep.mubr.bf16.mxu0 0
      %488 = vmatmul.mubr.bf16.gmra.mrb[0].mxu0 %v305
      %v489 = vpop.f32.mrb[0].mxu0
      %v490 = vadd.f32 0.0, %v489
      %v491 = vpop.f32.mrb[0].mxu0
      %v492 = vadd.f32 0.0, %v491
      %v493 = vpop.f32.mrb[0].mxu0
      %v494 = vadd.f32 0.0, %v493
      %v495 = vpop.f32.mrb[0].mxu0
      %v496 = vadd.f32 0.0, %v495
      %497 = vmatprep.mubr.bf16.mxu0 0
      %498 = vmatmul.mubr.bf16.gmra.mrb[0].mxu0 %v306
      %v499 = vpop.f32.mrb[0].mxu0
      %v500 = vadd.f32 0.0, %v499
      %v501 = vpop.f32.mrb[0].mxu0
      %v502 = vadd.f32 0.0, %v501
      %v503 = vpop.f32.mrb[0].mxu0
      %v504 = vadd.f32 0.0, %v503
      %v505 = vpop.f32.mrb[0].mxu0
      %v506 = vadd.f32 0.0, %v505
      %507 = vdwg.mxu0
      %v508 = vpack.c.bf16 %v434, %v430
      %v509 = vpack.c.bf16 %v444, %v440
      %v510 = vpack.c.bf16 %v454, %v450
      %v511 = vpack.c.bf16 %v464, %v460
      %v512 = vpack.c.bf16 %v474, %v470
      %v513 = vpack.c.bf16 %v484, %v480
      %v514 = vpack.c.bf16 %v494, %v490
      %v515 = vpack.c.bf16 %v504, %v500
      %v524 = vunpack.c.l.b16 %v508
      %v525 = vunpack.c.h.b16 %v508
      %v526 = vunpack.c.l.b16 %v509
      %v527 = vunpack.c.h.b16 %v509
      %v528 = vunpack.c.l.b16 %v510
      %v529 = vunpack.c.h.b16 %v510
      %v530 = vunpack.c.l.b16 %v511
      %v531 = vunpack.c.h.b16 %v511
      %v532 = vunpack.c.l.b16 %v512
      %v533 = vunpack.c.h.b16 %v512
      %v534 = vunpack.c.l.b16 %v513
      %v535 = vunpack.c.h.b16 %v513
      %v536 = vunpack.c.l.b16 %v514
      %v537 = vunpack.c.h.b16 %v514
      %v538 = vunpack.c.l.b16 %v515
      %v539 = vunpack.c.h.b16 %v515
      %v540 = vpack.c.b16 %v524, %v524
      %v541 = vpack.c.b16 %v525, %v525
      %v542 = vpack.c.b16 %v526, %v526
      %v543 = vpack.c.b16 %v527, %v527
      %v544 = vpack.c.b16 %v528, %v528
      %v545 = vpack.c.b16 %v529, %v529
      %v546 = vpack.c.b16 %v530, %v530
      %v547 = vpack.c.b16 %v531, %v531
      %v548 = vpack.c.b16 %v532, %v532
      %v549 = vpack.c.b16 %v533, %v533
      %v550 = vpack.c.b16 %v534, %v534
      %v551 = vpack.c.b16 %v535, %v535
      %v552 = vpack.c.b16 %v536, %v536
      %v553 = vpack.c.b16 %v537, %v537
      %v554 = vpack.c.b16 %v538, %v538
      %v555 = vpack.c.b16 %v539, %v539
      %572 = vst [vmem:[%s222] sm:$0xf] %v540
      %573 = vst [vmem:[%s222 + $0x4] sm:$0xf] %v541
      %574 = vst [vmem:[%s222 + $0x8] sm:$0xf] %v542
      %575 = vst [vmem:[%s222 + $0xc] sm:$0xf] %v543
      %576 = vst [vmem:[%s222 + $0x10] sm:$0xf] %v544
      %577 = vst [vmem:[%s222 + $0x14] sm:$0xf] %v545
      %578 = vst [vmem:[%s222 + $0x18] sm:$0xf] %v546
      %579 = vst [vmem:[%s222 + $0x1c] sm:$0xf] %v547
      %580 = vst [vmem:[%s222 + $0x20] sm:$0xf] %v548
      %581 = vst [vmem:[%s222 + $0x24] sm:$0xf] %v549
      %582 = vst [vmem:[%s222 + $0x28] sm:$0xf] %v550
      %583 = vst [vmem:[%s222 + $0x2c] sm:$0xf] %v551
      %584 = vst [vmem:[%s222 + $0x30] sm:$0xf] %v552
      %585 = vst [vmem:[%s222 + $0x34] sm:$0xf] %v553
      %586 = vst [vmem:[%s222 + $0x38] sm:$0xf] %v554
      %587 = vst [vmem:[%s222 + $0x3c] sm:$0xf] %v555
      %v588 = vpack.c.bf16 %v436, %v432
      %v589 = vpack.c.bf16 %v446, %v442
      %v590 = vpack.c.bf16 %v456, %v452
      %v591 = vpack.c.bf16 %v466, %v462
      %v592 = vpack.c.bf16 %v476, %v472
      %v593 = vpack.c.bf16 %v486, %v482
      %v594 = vpack.c.bf16 %v496, %v492
      %v595 = vpack.c.bf16 %v506, %v502
      %v604 = vunpack.c.l.b16 %v588
      %v605 = vunpack.c.h.b16 %v588
      %v606 = vunpack.c.l.b16 %v589
      %v607 = vunpack.c.h.b16 %v589
      %v608 = vunpack.c.l.b16 %v590
      %v609 = vunpack.c.h.b16 %v590
      %v610 = vunpack.c.l.b16 %v591
      %v611 = vunpack.c.h.b16 %v591
      %v612 = vunpack.c.l.b16 %v592
      %v613 = vunpack.c.h.b16 %v592
      %v614 = vunpack.c.l.b16 %v593
      %v615 = vunpack.c.h.b16 %v593
      %v616 = vunpack.c.l.b16 %v594
      %v617 = vunpack.c.h.b16 %v594
      %v618 = vunpack.c.l.b16 %v595
      %v619 = vunpack.c.h.b16 %v595
      %v620 = vpack.c.b16 %v604, %v604
      %v621 = vpack.c.b16 %v605, %v605
      %v622 = vpack.c.b16 %v606, %v606
      %v623 = vpack.c.b16 %v607, %v607
      %v624 = vpack.c.b16 %v608, %v608
      %v625 = vpack.c.b16 %v609, %v609
      %v626 = vpack.c.b16 %v610, %v610
      %v627 = vpack.c.b16 %v611, %v611
      %v628 = vpack.c.b16 %v612, %v612
      %v629 = vpack.c.b16 %v613, %v613
      %v630 = vpack.c.b16 %v614, %v614
      %v631 = vpack.c.b16 %v615, %v615
      %v632 = vpack.c.b16 %v616, %v616
      %v633 = vpack.c.b16 %v617, %v617
      %v634 = vpack.c.b16 %v618, %v618
      %v635 = vpack.c.b16 %v619, %v619
      %652 = vst [vmem:[%s232] sm:$0xf] %v620
      %653 = vst [vmem:[%s232 + $0x4] sm:$0xf] %v621
      %654 = vst [vmem:[%s232 + $0x8] sm:$0xf] %v622
      %655 = vst [vmem:[%s232 + $0xc] sm:$0xf] %v623
      %656 = vst [vmem:[%s232 + $0x10] sm:$0xf] %v624
      %657 = vst [vmem:[%s232 + $0x14] sm:$0xf] %v625
      %658 = vst [vmem:[%s232 + $0x18] sm:$0xf] %v626
      %659 = vst [vmem:[%s232 + $0x1c] sm:$0xf] %v627
      %660 = vst [vmem:[%s232 + $0x20] sm:$0xf] %v628
      %661 = vst [vmem:[%s232 + $0x24] sm:$0xf] %v629
      %662 = vst [vmem:[%s232 + $0x28] sm:$0xf] %v630
      %663 = vst [vmem:[%s232 + $0x2c] sm:$0xf] %v631
      %664 = vst [vmem:[%s232 + $0x30] sm:$0xf] %v632
      %665 = vst [vmem:[%s232 + $0x34] sm:$0xf] %v633
      %666 = vst [vmem:[%s232 + $0x38] sm:$0xf] %v634
      %667 = vst [vmem:[%s232 + $0x3c] sm:$0xf] %v635
      %s668 = smul.u32 16, %s20
      %p669 = scmp.lt.s32.totalorder %s19, 1
      %s670 = scalar_select %p669, %s19, 1
      %p671 = scmp.lt.s32.totalorder %s668, 15
      %s672 = scalar_select %p671, %s668, 15
      %s673 = smul.addr %s670, 16
      %s674 = sadd.s32 %s672, %s673
      %s675 = smul.addr %s674, 4
      %s676 = scalar_lea.vmem %s2, %s675
      %s677 = smul.u32 16, %s20
      %p678 = scmp.lt.s32.totalorder %s19, 1
      %s679 = scalar_select %p678, %s19, 1
      %p680 = scmp.lt.s32.totalorder %s677, 15
      %s681 = scalar_select %p680, %s677, 15
      %s682 = smul.addr %s679, 16
      %s683 = sadd.s32 %s681, %s682
      %s684 = smul.addr %s683, 4
      %s685 = scalar_lea.vmem %s3, %s684
      // Predicated region
      $region29: #{attention_layer.2} parent=27 // pred_check
        %p686 = pneg %p96
      $region30: #{attention_layer.2} parent=27 // pred_check_branch
        %688 = sbr.rel (%p686) target = $region32
      $region31: #{attention_layer.2} parent=27 // pred_region
        %s689 = smul.u32 16, %s20
      $region32: #{attention_layer.2} parent=27 // pred_fallthru
        _
      // Predicated region
      $region33: #{attention_layer.2} parent=27 // pred_check
        %p690 = pneg %p124
      $region34: #{attention_layer.2} parent=27 // pred_check_branch
        %692 = sbr.rel (%p690) target = $region36
      $region35: #{attention_layer.2} parent=27 // pred_region
        %s693 = smul.u32 16, %s20
      $region36: #{attention_layer.2} parent=27 // pred_fallthru
        _
    $region28: #{attention_layer.2} parent=5 // pred_fallthru
      _
    %p694 = scmp.le.s32.totalorder 2, %s10
    // Predicated region
    $region37: #{attention_layer.2} parent=5 // pred_check
      %p695 = pneg %p694
    $region38: #{attention_layer.2} parent=5 // pred_check_branch
      %697 = sbr.rel (%p695) target = $region40
    $region39: #{attention_layer.2} parent=5 // pred_region
      %s698 = ssub.s32 %s10, 2
      // Predicated region
      $region41: #{attention_layer.2} parent=39 // pred_check
        %p699 = pneg %p102
      $region42: #{attention_layer.2} parent=39 // pred_check_branch
        %701 = sbr.rel (%p699) target = $region44
      $region43: #{attention_layer.2} parent=39 // pred_region
        %s702 = smul.u32 16, %s22
        %p703 = scmp.lt.s32.totalorder %s21, 1
        %s704 = scalar_select %p703, %s21, 1
        %p705 = scmp.lt.s32.totalorder %s702, 15
        %s706 = scalar_select %p705, %s702, 15
        %s707 = smul.addr %s704, 16
        %s708 = sadd.s32 %s706, %s707
        %s709 = smul.addr %s708, 4
        %s710 = scalar_lea.vmem %s2, %s709
      $region44: #{attention_layer.2} parent=39 // pred_fallthru
        _
      // Predicated region
      $region45: #{attention_layer.2} parent=39 // pred_check
        %p711 = pneg %p130
      $region46: #{attention_layer.2} parent=39 // pred_check_branch
        %713 = sbr.rel (%p711) target = $region48
      $region47: #{attention_layer.2} parent=39 // pred_region
        %s714 = smul.u32 16, %s22
        %p715 = scmp.lt.s32.totalorder %s21, 1
        %s716 = scalar_select %p715, %s21, 1
        %p717 = scmp.lt.s32.totalorder %s714, 15
        %s718 = scalar_select %p717, %s714, 15
        %s719 = smul.addr %s716, 16
        %s720 = sadd.s32 %s718, %s719
        %s721 = smul.addr %s720, 4
        %s722 = scalar_lea.vmem %s3, %s721
      $region48: #{attention_layer.2} parent=39 // pred_fallthru
        _
    $region40: #{attention_layer.2} parent=5 // pred_fallthru
      _
  $region6: #{attention_layer.2} parent=0 // loop_footer
    %s14 = sadd.s32 1, %s10
  $region7: #{attention_layer.2} parent=0 // loop_footer_branch
    %9 = sbr.rel target = $region3
  $region8: #{attention_layer.2} parent=0 // loop_exit
    _

// kernel: attention_layer.3
$region0: #{attention_layer.3}
  #allocation0 [shape = 'u32[]', space=smem, size = 0x4, offset = 0x4, fixed_abs, tag = 'smem constant byte address 0x4 - core index']
  #allocation1 [shape = 'u32[144,128]{1,0:T(1,128)}', space=vmem, size = 0x12000, scoped, tag = 'internal scratch']
  #allocation2 [shape = 'bf16[128,128]{1,0:T(16,128)(2,1)}', space=vmem, size = 0x8000, scoped, tag = 'scratch operand']
  #allocation3 [shape = 'f32[128,1]{1,0:T(8,128)}', space=vmem, size = 0x10000, scoped, tag = 'scratch operand']
  #allocation4 [shape = 'f32[128,1]{1,0:T(8,128)}', space=vmem, size = 0x10000, scoped, tag = 'scratch operand']
  #allocation5 [shape = 'f32[128,128]{1,0:T(8,128)}', space=vmem, size = 0x10000, scoped, tag = 'scratch operand']
  %s0 = inlined_call_operand.vmem [shape: bf16[2,128,128], index: 0, kind: input, shape index: {}]
  %s1 = inlined_call_operand.vmem [shape: s8[2,128,128], index: 1, kind: input, shape index: {}]
  %s2 = inlined_call_operand.vmem [shape: bf16[2,128,128], index: 2, kind: input, shape index: {}]
  %s3 = inlined_call_operand.vmem [shape: bf16[2,128,128], index: 3, kind: input, shape index: {}]
  %s4 = inlined_call_operand.vmem [shape: bf16[128,128], index: 4, kind: input, shape index: {}]
  %s5 = inlined_call_operand.vmem [shape: f32[2,128,128], index: 5, kind: output, shape index: {}]
  %s6 = sld [smem:[#allocation0]]
  $region61: #{attention_layer.3} parent=0
    _
  %s8 = ssub.s32 1, %s6
  %s9 = scalar_select 0, %s8, %s6
  loop: start=0, step=1, limit=4
  $region2: #{attention_layer.3} parent=0 // loop_pre_header
    _
  $region3: #{attention_layer.3} parent=0 // loop_header
    %s11 = sphi 0, %s15
    %p12 = scmp.ge.s32.totalorder %s11, 4
    %s18 = sphi 0, %s37
    %s19 = sphi 0, %s33
    %s20 = sphi 0, %s29
    %s21 = sphi 0, %s18
    %s22 = sphi 0, %s19
    %s23 = sphi 0, %s20
    %s24 = sphi 0, %s21
    %s25 = sphi 0, %s22
    %s26 = sphi 0, %s23
    %s42 = sphi 0, %s44
    %s45 = sphi 0, %s42
    %s46 = sphi 0, %s45
    %s62 = sphi 0, %s46
    %s72 = sphi 0, %s74
    %s75 = sphi 0, %s72
    %s76 = sphi 0, %s75
    %s92 = sphi 0, %s76
    %s100 = sphi 0, %s102
    %s103 = sphi 0, %s100
    %s104 = sphi 0, %s103
    %s120 = sphi 0, %s104
    %s128 = sphi 0, %s130
    %s131 = sphi 0, %s128
    %s132 = sphi 0, %s131
    %s148 = sphi 0, %s132
    %s152 = sphi 0, %s152
    %s154 = sphi 0, %s152
    %s155 = sphi 0, %s154
    %s169 = sphi 0, %s155
    %s177 = sphi 0, %s179
    %s180 = sphi 0, %s177
    %s181 = sphi 0, %s180
    %s197 = sphi 0, %s181
  $region4: #{attention_layer.3} parent=0 // loop_header_branch
    %14 = sbr.rel (%p12) target = $region8
  $region5: #{attention_layer.3} parent=0 // loop_body
    %s16 = ssub.s32 %s11, 1
    %s17 = ssub.s32 %s11, 2
    %s27 = sadd.s32 1, %s20
    %p28 = scmp.ge.s32.totalorder %s27, 1
    %s29 = scalar_select %p28, 0, %s27
    %s30 = sadd.s32 1, %s19
    %s31 = scalar_select %p28, %s30, %s19
    %p32 = scmp.ge.s32.totalorder %s31, 1
    %s33 = scalar_select %p32, 0, %s31
    %s34 = sadd.s32 1, %s18
    %s35 = scalar_select %p32, %s34, %s18
    %p36 = scmp.ge.s32.totalorder %s35, 2
    %s37 = scalar_select %p36, 0, %s35
    %s38 = ssub.s32 %s18, %s37
    %s39 = ssub.s32 %s19, %s33
    %s40 = sor.u32 %s38, %s39
    %p41 = scmp.eq.s32.totalorder %s40, 0
    %s43 = sadd.s32 %s42, 1
    %s44 = scalar_select %p41, %s42, %s43
    %p47 = pneg %p41
    %p48 = scmp.eq.s32.totalorder %s11, 1
    %p49 = por %p47, %p48
    %p50 = scmp.ne.s32.totalorder %s42, %s45
    %p51 = scmp.eq.s32.totalorder %s11, 0
    %p52 = por %p50, %p51
    %p53 = scmp.ne.s32.totalorder %s42, %s45
    %p54 = scmp.eq.s32.totalorder %s16, 1
    %p55 = por %p53, %p54
    %p56 = scmp.ne.s32.totalorder %s45, %s46
    %p57 = scmp.eq.s32.totalorder %s16, 0
    %p58 = por %p56, %p57
    %p59 = scmp.ne.s32.totalorder %s45, %s46
    %p60 = scmp.eq.s32.totalorder %s17, 1
    %p61 = por %p59, %p60
    %p63 = scmp.ne.s32.totalorder %s46, %s62
    %p64 = scmp.eq.s32.totalorder %s17, 0
    %p65 = por %p63, %p64
    %s66 = ssub.s32 %s18, %s37
    %s67 = ssub.s32 %s19, %s33
    %s68 = sor.u32 %s66, %s67
    %s69 = ssub.s32 %s20, %s29
    %s70 = sor.u32 %s68, %s69
    %p71 = scmp.eq.s32.totalorder %s70, 0
    %s73 = sadd.s32 %s72, 1
    %s74 = scalar_select %p71, %s72, %s73
    %p77 = pneg %p71
    %p78 = scmp.eq.s32.totalorder %s11, 1
    %p79 = por %p77, %p78
    %p80 = scmp.ne.s32.totalorder %s72, %s75
    %p81 = scmp.eq.s32.totalorder %s11, 0
    %p82 = por %p80, %p81
    %p83 = scmp.ne.s32.totalorder %s72, %s75
    %p84 = scmp.eq.s32.totalorder %s16, 1
    %p85 = por %p83, %p84
    %p86 = scmp.ne.s32.totalorder %s75, %s76
    %p87 = scmp.eq.s32.totalorder %s16, 0
    %p88 = por %p86, %p87
    %p89 = scmp.ne.s32.totalorder %s75, %s76
    %p90 = scmp.eq.s32.totalorder %s17, 1
    %p91 = por %p89, %p90
    %p93 = scmp.ne.s32.totalorder %s76, %s92
    %p94 = scmp.eq.s32.totalorder %s17, 0
    %p95 = por %p93, %p94
    %s96 = ssub.s32 %s18, %s37
    %s97 = ssub.s32 %s20, %s29
    %s98 = sor.u32 %s96, %s97
    %p99 = scmp.eq.s32.totalorder %s98, 0
    %s101 = sadd.s32 %s100, 1
    %s102 = scalar_select %p99, %s100, %s101
    %p105 = pneg %p99
    %p106 = scmp.eq.s32.totalorder %s11, 1
    %p107 = por %p105, %p106
    %p108 = scmp.ne.s32.totalorder %s100, %s103
    %p109 = scmp.eq.s32.totalorder %s11, 0
    %p110 = por %p108, %p109
    %p111 = scmp.ne.s32.totalorder %s100, %s103
    %p112 = scmp.eq.s32.totalorder %s16, 1
    %p113 = por %p111, %p112
    %p114 = scmp.ne.s32.totalorder %s103, %s104
    %p115 = scmp.eq.s32.totalorder %s16, 0
    %p116 = por %p114, %p115
    %p117 = scmp.ne.s32.totalorder %s103, %s104
    %p118 = scmp.eq.s32.totalorder %s17, 1
    %p119 = por %p117, %p118
    %p121 = scmp.ne.s32.totalorder %s104, %s120
    %p122 = scmp.eq.s32.totalorder %s17, 0
    %p123 = por %p121, %p122
    %s124 = ssub.s32 %s18, %s37
    %s125 = ssub.s32 %s20, %s29
    %s126 = sor.u32 %s124, %s125
    %p127 = scmp.eq.s32.totalorder %s126, 0
    %s129 = sadd.s32 %s128, 1
    %s130 = scalar_select %p127, %s128, %s129
    %p133 = pneg %p127
    %p134 = scmp.eq.s32.totalorder %s11, 1
    %p135 = por %p133, %p134
    %p136 = scmp.ne.s32.totalorder %s128, %s131
    %p137 = scmp.eq.s32.totalorder %s11, 0
    %p138 = por %p136, %p137
    %p139 = scmp.ne.s32.totalorder %s128, %s131
    %p140 = scmp.eq.s32.totalorder %s16, 1
    %p141 = por %p139, %p140
    %p142 = scmp.ne.s32.totalorder %s131, %s132
    %p143 = scmp.eq.s32.totalorder %s16, 0
    %p144 = por %p142, %p143
    %p145 = scmp.ne.s32.totalorder %s131, %s132
    %p146 = scmp.eq.s32.totalorder %s17, 1
    %p147 = por %p145, %p146
    %p149 = scmp.ne.s32.totalorder %s132, %s148
    %p150 = scmp.eq.s32.totalorder %s17, 0
    %p151 = por %p149, %p150
    %s153 = sadd.s32 %s152, 1
    %p156 = scmp.eq.s32.totalorder %s11, 1
    %p157 = scmp.ne.s32.totalorder %s152, %s154
    %p158 = scmp.eq.s32.totalorder %s11, 0
    %p159 = por %p157, %p158
    %p160 = scmp.ne.s32.totalorder %s152, %s154
    %p161 = scmp.eq.s32.totalorder %s16, 1
    %p162 = por %p160, %p161
    %p163 = scmp.ne.s32.totalorder %s154, %s155
    %p164 = scmp.eq.s32.totalorder %s16, 0
    %p165 = por %p163, %p164
    %p166 = scmp.ne.s32.totalorder %s154, %s155
    %p167 = scmp.eq.s32.totalorder %s17, 1
    %p168 = por %p166, %p167
    %p170 = scmp.ne.s32.totalorder %s155, %s169
    %p171 = scmp.eq.s32.totalorder %s17, 0
    %p172 = por %p170, %p171
    %s173 = ssub.s32 %s18, %s37
    %s174 = ssub.s32 %s19, %s33
    %s175 = sor.u32 %s173, %s174
    %p176 = scmp.eq.s32.totalorder %s175, 0
    %s178 = sadd.s32 %s177, 1
    %s179 = scalar_select %p176, %s177, %s178
    %p182 = pneg %p176
    %p183 = scmp.eq.s32.totalorder %s11, 1
    %p184 = por %p182, %p183
    %p185 = scmp.ne.s32.totalorder %s177, %s180
    %p186 = scmp.eq.s32.totalorder %s11, 0
    %p187 = por %p185, %p186
    %p188 = scmp.ne.s32.totalorder %s177, %s180
    %p189 = scmp.eq.s32.totalorder %s16, 1
    %p190 = por %p188, %p189
    %p191 = scmp.ne.s32.totalorder %s180, %s181
    %p192 = scmp.eq.s32.totalorder %s16, 0
    %p193 = por %p191, %p192
    %p194 = scmp.ne.s32.totalorder %s180, %s181
    %p195 = scmp.eq.s32.totalorder %s17, 1
    %p196 = por %p194, %p195
    %p198 = scmp.ne.s32.totalorder %s181, %s197
    %p199 = scmp.eq.s32.totalorder %s17, 0
    %p200 = por %p198, %p199
    %p201 = scmp.le.s32.totalorder 1, %s11
    %p202 = scmp.lt.s32.totalorder %s11, 3
    %p203 = pnand %p201, %p202
    %p204 = pneg %p203
    // Predicated region
    $region9: #{attention_layer.3} parent=5 // pred_check
      _
    $region10: #{attention_layer.3} parent=5 // pred_check_branch
      %206 = sbr.rel (%p203) target = $region12
    $region11: #{attention_layer.3} parent=5 // pred_region
      %s207 = ssub.s32 %s11, 1
      // Predicated region
      $region13: #{attention_layer.3} parent=11 // pred_check
        %p208 = pneg %p165
      $region14: #{attention_layer.3} parent=11 // pred_check_branch
        %210 = sbr.rel (%p208) target = $region16
      $region15: #{attention_layer.3} parent=11 // pred_region
        _
      $region16: #{attention_layer.3} parent=11 // pred_fallthru
        _
    $region12: #{attention_layer.3} parent=5 // pred_fallthru
      _
    %p211 = scmp.lt.s32.totalorder %s11, 2
    // Predicated region
    $region17: #{attention_layer.3} parent=5 // pred_check
      %p212 = pneg %p211
    $region18: #{attention_layer.3} parent=5 // pred_check_branch
      %214 = sbr.rel (%p212) target = $region20
    $region19: #{attention_layer.3} parent=5 // pred_region
      // Predicated region
      $region21: #{attention_layer.3} parent=19 // pred_check
        %p215 = pneg %p52
      $region22: #{attention_layer.3} parent=19 // pred_check_branch
        %217 = sbr.rel (%p215) target = $region24
      $region23: #{attention_layer.3} parent=19 // pred_region
        %s218 = smul.u32 16, %s19
        %p219 = scmp.lt.s32.totalorder %s18, 1
        %s220 = scalar_select %p219, %s18, 1
        %p221 = scmp.lt.s32.totalorder %s218, 15
        %s222 = scalar_select %p221, %s218, 15
        %s223 = smul.addr %s220, 16
        %s224 = sadd.s32 %s222, %s223
        %s225 = smul.addr %s224, 4
        %s226 = scalar_lea.vmem %s0, %s225
        %s227 = smul.u32 16, %s19
      $region24: #{attention_layer.3} parent=19 // pred_fallthru
        _
      // Predicated region
      $region25: #{attention_layer.3} parent=19 // pred_check
        %p228 = pneg %p82
      $region26: #{attention_layer.3} parent=19 // pred_check_branch
        %230 = sbr.rel (%p228) target = $region28
      $region27: #{attention_layer.3} parent=19 // pred_region
        %s231 = smul.u32 4, %s19
        %p232 = scmp.lt.s32.totalorder %s18, 1
        %s233 = scalar_select %p232, %s18, 1
        %p234 = scmp.lt.s32.totalorder %s231, 3
        %s235 = scalar_select %p234, %s231, 3
        %p236 = scmp.lt.s32.totalorder %s20, 0
        %s237 = scalar_select %p236, %s20, 0
        %s238 = sadd.s32 %s237, %s235
        %s239 = smul.addr %s233, 4
        %s240 = sadd.s32 %s238, %s239
        %s241 = smul.addr %s240, 8
        %s242 = scalar_lea.vmem %s1, %s241
        %s243 = smul.u32 4, %s19
      $region28: #{attention_layer.3} parent=19 // pred_fallthru
        _
      // Predicated region
      $region29: #{attention_layer.3} parent=19 // pred_check
        %p244 = pneg %p110
      $region30: #{attention_layer.3} parent=19 // pred_check_branch
        %246 = sbr.rel (%p244) target = $region32
      $region31: #{attention_layer.3} parent=19 // pred_region
        %s247 = smul.u32 16, %s20
        %p248 = scmp.lt.s32.totalorder %s18, 1
        %s249 = scalar_select %p248, %s18, 1
        %p250 = scmp.lt.s32.totalorder %s247, 15
        %s251 = scalar_select %p250, %s247, 15
        %s252 = smul.addr %s249, 16
        %s253 = sadd.s32 %s251, %s252
        %s254 = smul.addr %s253, 4
        %s255 = scalar_lea.vmem %s2, %s254
        %s256 = smul.u32 16, %s20
      $region32: #{attention_layer.3} parent=19 // pred_fallthru
        _
      // Predicated region
      $region33: #{attention_layer.3} parent=19 // pred_check
        %p257 = pneg %p138
      $region34: #{attention_layer.3} parent=19 // pred_check_branch
        %259 = sbr.rel (%p257) target = $region36
      $region35: #{attention_layer.3} parent=19 // pred_region
        %s260 = smul.u32 16, %s20
        %p261 = scmp.lt.s32.totalorder %s18, 1
        %s262 = scalar_select %p261, %s18, 1
        %p263 = scmp.lt.s32.totalorder %s260, 15
        %s264 = scalar_select %p263, %s260, 15
        %s265 = smul.addr %s262, 16
        %s266 = sadd.s32 %s264, %s265
        %s267 = smul.addr %s266, 4
        %s268 = scalar_lea.vmem %s3, %s267
        %s269 = smul.u32 16, %s20
      $region36: #{attention_layer.3} parent=19 // pred_fallthru
        _
    $region20: #{attention_layer.3} parent=5 // pred_fallthru
      _
    %p270 = scmp.le.s32.totalorder 1, %s11
    %p271 = scmp.lt.s32.totalorder %s11, 3
    %p272 = pnand %p270, %p271
    %p273 = pneg %p272
    // Predicated region
    $region37: #{attention_layer.3} parent=5 // pred_check
      _
    $region38: #{attention_layer.3} parent=5 // pred_check_branch
      %275 = sbr.rel (%p272) target = $region40
    $region39: #{attention_layer.3} parent=5 // pred_region
      %s276 = ssub.s32 %s11, 1
      %s277 = smul.u32 16, %s22
      %p278 = scmp.lt.s32.totalorder %s21, 1
      %s279 = scalar_select %p278, %s21, 1
      %p280 = scmp.lt.s32.totalorder %s277, 15
      %s281 = scalar_select %p280, %s277, 15
      %s282 = smul.addr %s279, 16
      %s283 = sadd.s32 %s281, %s282
      %s284 = smul.addr %s283, 4
      %s285 = scalar_lea.vmem %s0, %s284
      %p286 = pneg %p58
      %p287 = pneg %p55
      %s288 = smul.u32 4, %s22
      %p289 = scmp.lt.s32.totalorder %s21, 1
      %s290 = scalar_select %p289, %s21, 1
      %p291 = scmp.lt.s32.totalorder %s288, 3
      %s292 = scalar_select %p291, %s288, 3
      %p293 = scmp.lt.s32.totalorder %s23, 0
      %s294 = scalar_select %p293, %s23, 0
      %s295 = sadd.s32 %s294, %s292
      %s296 = smul.addr %s290, 4
      %s297 = sadd.s32 %s295, %s296
      %s298 = smul.addr %s297, 8
      %s299 = scalar_lea.vmem %s1, %s298
      %p300 = pneg %p88
      %p301 = pneg %p85
      %s302 = smul.u32 16, %s23
      %p303 = scmp.lt.s32.totalorder %s21, 1
      %s304 = scalar_select %p303, %s21, 1
      %p305 = scmp.lt.s32.totalorder %s302, 15
      %s306 = scalar_select %p305, %s302, 15
      %s307 = smul.addr %s304, 16
      %s308 = sadd.s32 %s306, %s307
      %s309 = smul.addr %s308, 4
      %s310 = scalar_lea.vmem %s2, %s309
      %p311 = pneg %p116
      %p312 = pneg %p113
      %s313 = smul.u32 16, %s23
      %p314 = scmp.lt.s32.totalorder %s21, 1
      %s315 = scalar_select %p314, %s21, 1
      %p316 = scmp.lt.s32.totalorder %s313, 15
      %s317 = scalar_select %p316, %s313, 15
      %s318 = smul.addr %s315, 16
      %s319 = sadd.s32 %s317, %s318
      %s320 = smul.addr %s319, 4
      %s321 = scalar_lea.vmem %s3, %s320
      %p322 = pneg %p144
      %p323 = pneg %p141
      %p324 = pneg %p165
      %p325 = pneg %p162
      %p326 = pneg %p193
      %p327 = pneg %p190
      %s328 = smul.u32 16, %s22
      %p329 = scmp.lt.s32.totalorder %s21, 1
      %s330 = scalar_select %p329, %s21, 1
      %p331 = scmp.lt.s32.totalorder %s328, 15
      %s332 = scalar_select %p331, %s328, 15
      %s333 = smul.addr %s330, 16
      %s334 = sadd.s32 %s332, %s333
      %s335 = smul.addr %s334, 8
      %s336 = scalar_lea.vmem %s5, %s335
      %s337 = smul.u32 16, %s22
      %p338 = scmp.lt.s32.totalorder %s21, 1
      %s339 = scalar_select %p338, %s21, 1
      %p340 = scmp.lt.s32.totalorder %s337, 15
      %s341 = scalar_select %p340, %s337, 15
      %s342 = smul.addr %s339, 16
      %s343 = sadd.s32 %s341, %s342
      %s344 = smul.addr %s343, 4
      %s345 = scalar_lea.vmem %s0, %s344
      %s346 = smul.u32 16, %s22
      %s347 = smul.u32 4, %s22
      %p348 = scmp.lt.s32.totalorder %s21, 1
      %s349 = scalar_select %p348, %s21, 1
      %p350 = scmp.lt.s32.totalorder %s347, 3
      %s351 = scalar_select %p350, %s347, 3
      %p352 = scmp.lt.s32.totalorder %s23, 0
      %s353 = scalar_select %p352, %s23, 0
      %s354 = sadd.s32 %s353, %s351
      %s355 = smul.addr %s349, 4
      %s356 = sadd.s32 %s354, %s355
      %s357 = smul.addr %s356, 8
      %s358 = scalar_lea.vmem %s1, %s357
      %s359 = smul.u32 4, %s22
      %s360 = smul.u32 16, %s23
      %p361 = scmp.lt.s32.totalorder %s21, 1
      %s362 = scalar_select %p361, %s21, 1
      %p363 = scmp.lt.s32.totalorder %s360, 15
      %s364 = scalar_select %p363, %s360, 15
      %s365 = smul.addr %s362, 16
      %s366 = sadd.s32 %s364, %s365
      %s367 = smul.addr %s366, 4
      %s368 = scalar_lea.vmem %s2, %s367
      %s369 = smul.u32 16, %s23
      %s370 = smul.u32 16, %s23
      %p371 = scmp.lt.s32.totalorder %s21, 1
      %s372 = scalar_select %p371, %s21, 1
      %p373 = scmp.lt.s32.totalorder %s370, 15
      %s374 = scalar_select %p373, %s370, 15
      %s375 = smul.addr %s372, 16
      %s376 = sadd.s32 %s374, %s375
      %s377 = smul.addr %s376, 4
      %s378 = scalar_lea.vmem %s3, %s377
      %s379 = smul.u32 16, %s23
      %s380 = smul.u32 16, %s22
      %p381 = scmp.lt.s32.totalorder %s21, 1
      %s382 = scalar_select %p381, %s21, 1
      %p383 = scmp.lt.s32.totalorder %s380, 15
      %s384 = scalar_select %p383, %s380, 15
      %s385 = smul.addr %s382, 16
      %s386 = sadd.s32 %s384, %s385
      %s387 = smul.addr %s386, 8
      %s388 = scalar_lea.vmem %s5, %s387
      %s389 = smul.u32 16, %s22
      %p391 = scmp.eq.s32.totalorder %s23, 0
      // Predicated region
      $region41: #{attention_layer.3} parent=39 // pred_check
        %p392 = pneg %p391
      $region42: #{attention_layer.3} parent=39 // pred_check_branch
        %394 = sbr.rel (%p392) target = $region44
      $region43: #{attention_layer.3} parent=39 // pred_region
        %v395 = vld [vmem:[%s345] sm:$0xf]
        %v396 = vld [vmem:[%s345 + $0x4] sm:$0xf]
        %v397 = vld [vmem:[%s345 + $0x8] sm:$0xf]
        %v398 = vld [vmem:[%s345 + $0xc] sm:$0xf]
        %v399 = vld [vmem:[%s345 + $0x10] sm:$0xf]
        %v400 = vld [vmem:[%s345 + $0x14] sm:$0xf]
        %v401 = vld [vmem:[%s345 + $0x18] sm:$0xf]
        %v402 = vld [vmem:[%s345 + $0x1c] sm:$0xf]
        %v403 = vld [vmem:[%s345 + $0x20] sm:$0xf]
        %v404 = vld [vmem:[%s345 + $0x24] sm:$0xf]
        %v405 = vld [vmem:[%s345 + $0x28] sm:$0xf]
        %v406 = vld [vmem:[%s345 + $0x2c] sm:$0xf]
        %v407 = vld [vmem:[%s345 + $0x30] sm:$0xf]
        %v408 = vld [vmem:[%s345 + $0x34] sm:$0xf]
        %v409 = vld [vmem:[%s345 + $0x38] sm:$0xf]
        %v410 = vld [vmem:[%s345 + $0x3c] sm:$0xf]
        %v411 = vld [vmem:[%s4] sm:$0xf]
        %v412 = vld [vmem:[%s4 + $0x4] sm:$0xf]
        %v413 = vld [vmem:[%s4 + $0x8] sm:$0xf]
        %v414 = vld [vmem:[%s4 + $0xc] sm:$0xf]
        %v415 = vld [vmem:[%s4 + $0x10] sm:$0xf]
        %v416 = vld [vmem:[%s4 + $0x14] sm:$0xf]
        %v417 = vld [vmem:[%s4 + $0x18] sm:$0xf]
        %v418 = vld [vmem:[%s4 + $0x1c] sm:$0xf]
        %v419 = vld [vmem:[%s4 + $0x20] sm:$0xf]
        %v420 = vld [vmem:[%s4 + $0x24] sm:$0xf]
        %v421 = vld [vmem:[%s4 + $0x28] sm:$0xf]
        %v422 = vld [vmem:[%s4 + $0x2c] sm:$0xf]
        %v423 = vld [vmem:[%s4 + $0x30] sm:$0xf]
        %v424 = vld [vmem:[%s4 + $0x34] sm:$0xf]
        %v425 = vld [vmem:[%s4 + $0x38] sm:$0xf]
        %v426 = vld [vmem:[%s4 + $0x3c] sm:$0xf]
        %v443 = vunpack.c.l.b16 %v395
        %v444 = vunpack.c.l.b16 %v396
        %v445 = vunpack.c.l.b16 %v397
        %v446 = vunpack.c.l.b16 %v398
        %v447 = vunpack.c.l.b16 %v399
        %v448 = vunpack.c.l.b16 %v400
        %v449 = vunpack.c.l.b16 %v401
        %v450 = vunpack.c.l.b16 %v402
        %v451 = vunpack.c.l.b16 %v403
        %v452 = vunpack.c.l.b16 %v404
        %v453 = vunpack.c.l.b16 %v405
        %v454 = vunpack.c.l.b16 %v406
        %v455 = vunpack.c.l.b16 %v407
        %v456 = vunpack.c.l.b16 %v408
        %v457 = vunpack.c.l.b16 %v409
        %v458 = vunpack.c.l.b16 %v410
        %v459 = vpack.c.b16 %v444, %v443
        %v460 = vpack.c.b16 %v446, %v445
        %v461 = vpack.c.b16 %v448, %v447
        %v462 = vpack.c.b16 %v450, %v449
        %v463 = vpack.c.b16 %v452, %v451
        %v464 = vpack.c.b16 %v454, %v453
        %v465 = vpack.c.b16 %v456, %v455
        %v466 = vpack.c.b16 %v458, %v457
        %v491 = vunpack.c.l.b16 %v411
        %v492 = vunpack.c.l.b16 %v412
        %v493 = vunpack.c.l.b16 %v413
        %v494 = vunpack.c.l.b16 %v414
        %v495 = vunpack.c.l.b16 %v415
        %v496 = vunpack.c.l.b16 %v416
        %v497 = vunpack.c.l.b16 %v417
        %v498 = vunpack.c.l.b16 %v418
        %v499 = vunpack.c.l.b16 %v419
        %v500 = vunpack.c.l.b16 %v420
        %v501 = vunpack.c.l.b16 %v421
        %v502 = vunpack.c.l.b16 %v422
        %v503 = vunpack.c.l.b16 %v423
        %v504 = vunpack.c.l.b16 %v424
        %v505 = vunpack.c.l.b16 %v425
        %v506 = vunpack.c.l.b16 %v426
        %v507 = vpack.c.b16 %v492, %v491
        %v508 = vpack.c.b16 %v494, %v493
        %v509 = vpack.c.b16 %v496, %v495
        %v510 = vpack.c.b16 %v498, %v497
        %v511 = vpack.c.b16 %v500, %v499
        %v512 = vpack.c.b16 %v502, %v501
        %v513 = vpack.c.b16 %v504, %v503
        %v514 = vpack.c.b16 %v506, %v505
        %523 = vmatprep.subr.bf16.mxu0 0
        %524 = vmatpush1.bf16.msra.mxu0 %v507
        %525 = vmatprep.subr.bf16.mxu0 0
        %526 = vmatpush1.bf16.msra.mxu0 %v508
        %527 = vmatprep.subr.bf16.mxu0 0
        %528 = vmatpush1.bf16.msra.mxu0 %v509
        %529 = vmatprep.subr.bf16.mxu0 0
        %530 = vmatpush1.bf16.msra.mxu0 %v510
        %531 = vmatprep.subr.bf16.mxu0 0
        %532 = vmatpush1.bf16.msra.mxu0 %v511
        %533 = vmatprep.subr.bf16.mxu0 0
        %534 = vmatpush1.bf16.msra.mxu0 %v512
        %535 = vmatprep.subr.bf16.mxu0 0
        %536 = vmatpush1.bf16.msra.mxu0 %v513
        %537 = vmatprep.subr.bf16.mxu0 0
        %538 = vmatpush1.bf16.msra.mxu0 %v514
        %539 = vmatprep.subr.bf16.mxu0 0
        %540 = vmatpush1.bf16.msra.mxu0 0
        %541 = vmatprep.subr.bf16.mxu0 0
        %542 = vmatpush1.bf16.msra.mxu0 0
        %543 = vmatprep.subr.bf16.mxu0 0
        %544 = vmatpush1.bf16.msra.mxu0 0
        %545 = vmatprep.subr.bf16.mxu0 0
        %546 = vmatpush1.bf16.msra.mxu0 0
        %547 = vmatprep.subr.bf16.mxu0 0
        %548 = vmatpush1.bf16.msra.mxu0 0
        %549 = vmatprep.subr.bf16.mxu0 0
        %550 = vmatpush1.bf16.msra.mxu0 0
        %551 = vmatprep.subr.bf16.mxu0 0
        %552 = vmatpush1.bf16.msra.mxu0 0
        %553 = vmatprep.subr.bf16.mxu0 0
        %554 = vmatpush1.bf16.msra.mxu0 0
        %555 = vmatprep.mubr.bf16.mxu0 0
        %556 = vmatmul.mubr.bf16.gmra.mrb[0].mxu0 %v459
        %v557 = vpop.f32.mrb[0].mxu0
        %v558 = vadd.f32 0.0, %v557
        %v559 = vpop.f32.mrb[0].mxu0
        %v560 = vpop.f32.mrb[0].mxu0
        %v561 = vadd.f32 0.0, %v560
        %v562 = vpop.f32.mrb[0].mxu0
        %563 = vmatprep.mubr.bf16.mxu0 0
        %564 = vmatmul.mubr.bf16.gmra.mrb[0].mxu0 %v460
        %v565 = vpop.f32.mrb[0].mxu0
        %v566 = vadd.f32 0.0, %v565
        %v567 = vpop.f32.mrb[0].mxu0
        %v568 = vpop.f32.mrb[0].mxu0
        %v569 = vadd.f32 0.0, %v568
        %v570 = vpop.f32.mrb[0].mxu0
        %571 = vmatprep.mubr.bf16.mxu0 0
        %572 = vmatmul.mubr.bf16.gmra.mrb[0].mxu0 %v461
        %v573 = vpop.f32.mrb[0].mxu0
        %v574 = vadd.f32 0.0, %v573
        %v575 = vpop.f32.mrb[0].mxu0
        %v576 = vpop.f32.mrb[0].mxu0
        %v577 = vadd.f32 0.0, %v576
        %v578 = vpop.f32.mrb[0].mxu0
        %579 = vmatprep.mubr.bf16.mxu0 0
        %580 = vmatmul.mubr.bf16.gmra.mrb[0].mxu0 %v462
        %v581 = vpop.f32.mrb[0].mxu0
        %v582 = vadd.f32 0.0, %v581
        %v583 = vpop.f32.mrb[0].mxu0
        %v584 = vpop.f32.mrb[0].mxu0
        %v585 = vadd.f32 0.0, %v584
        %v586 = vpop.f32.mrb[0].mxu0
        %587 = vmatprep.mubr.bf16.mxu0 0
        %588 = vmatmul.mubr.bf16.gmra.mrb[0].mxu0 %v463
        %v589 = vpop.f32.mrb[0].mxu0
        %v590 = vadd.f32 0.0, %v589
        %v591 = vpop.f32.mrb[0].mxu0
        %v592 = vpop.f32.mrb[0].mxu0
        %v593 = vadd.f32 0.0, %v592
        %v594 = vpop.f32.mrb[0].mxu0
        %595 = vmatprep.mubr.bf16.mxu0 0
        %596 = vmatmul.mubr.bf16.gmra.mrb[0].mxu0 %v464
        %v597 = vpop.f32.mrb[0].mxu0
        %v598 = vadd.f32 0.0, %v597
        %v599 = vpop.f32.mrb[0].mxu0
        %v600 = vpop.f32.mrb[0].mxu0
        %v601 = vadd.f32 0.0, %v600
        %v602 = vpop.f32.mrb[0].mxu0
        %603 = vmatprep.mubr.bf16.mxu0 0
        %604 = vmatmul.mubr.bf16.gmra.mrb[0].mxu0 %v465
        %v605 = vpop.f32.mrb[0].mxu0
        %v606 = vadd.f32 0.0, %v605
        %v607 = vpop.f32.mrb[0].mxu0
        %v608 = vpop.f32.mrb[0].mxu0
        %v609 = vadd.f32 0.0, %v608
        %v610 = vpop.f32.mrb[0].mxu0
        %611 = vmatprep.mubr.bf16.mxu0 0
        %612 = vmatmul.mubr.bf16.gmra.mrb[0].mxu0 %v466
        %v613 = vpop.f32.mrb[0].mxu0
        %v614 = vadd.f32 0.0, %v613
        %v615 = vpop.f32.mrb[0].mxu0
        %v616 = vpop.f32.mrb[0].mxu0
        %v617 = vadd.f32 0.0, %v616
        %v618 = vpop.f32.mrb[0].mxu0
        %619 = vdwg.mxu0
        %v620 = vpack.c.bf16 %v561, %v558
        %v621 = vpack.c.bf16 %v569, %v566
        %v622 = vpack.c.bf16 %v577, %v574
        %v623 = vpack.c.bf16 %v585, %v582
        %v624 = vpack.c.bf16 %v593, %v590
        %v625 = vpack.c.bf16 %v601, %v598
        %v626 = vpack.c.bf16 %v609, %v606
        %v627 = vpack.c.bf16 %v617, %v614
        %628 = vst [vmem:[#allocation2] sm:$0xff] %v620
        %629 = vst [vmem:[#allocation2 + $0x8] sm:$0xff] %v621
        %630 = vst [vmem:[#allocation2 + $0x10] sm:$0xff] %v622
        %631 = vst [vmem:[#allocation2 + $0x18] sm:$0xff] %v623
        %632 = vst [vmem:[#allocation2 + $0x20] sm:$0xff] %v624
        %633 = vst [vmem:[#allocation2 + $0x28] sm:$0xff] %v625
        %634 = vst [vmem:[#allocation2 + $0x30] sm:$0xff] %v626
        %635 = vst [vmem:[#allocation2 + $0x38] sm:$0xff] %v627
        %vm636 = vcmask 7168
        %637 = vst.msk [vmem:[#allocation3] sm:$0xff] %vm636, -inf
        %638 = vst.msk [vmem:[#allocation3 + $0x8] sm:$0xff] %vm636, -inf
        %639 = vst.msk [vmem:[#allocation3 + $0x10] sm:$0xff] %vm636, -inf
        %640 = vst.msk [vmem:[#allocation3 + $0x18] sm:$0xff] %vm636, -inf
        %641 = vst.msk [vmem:[#allocation3 + $0x20] sm:$0xff] %vm636, -inf
        %642 = vst.msk [vmem:[#allocation3 + $0x28] sm:$0xff] %vm636, -inf
        %643 = vst.msk [vmem:[#allocation3 + $0x30] sm:$0xff] %vm636, -inf
        %644 = vst.msk [vmem:[#allocation3 + $0x38] sm:$0xff] %vm636, -inf
        %645 = vst.msk [vmem:[#allocation3 + $0x40] sm:$0xff] %vm636, -inf
        %646 = vst.msk [vmem:[#allocation3 + $0x48] sm:$0xff] %vm636, -inf
        %647 = vst.msk [vmem:[#allocation3 + $0x50] sm:$0xff] %vm636, -inf
        %648 = vst.msk [vmem:[#allocation3 + $0x58] sm:$0xff] %vm636, -inf
        %649 = vst.msk [vmem:[#allocation3 + $0x60] sm:$0xff] %vm636, -inf
        %650 = vst.msk [vmem:[#allocation3 + $0x68] sm:$0xff] %vm636, -inf
        %651 = vst.msk [vmem:[#allocation3 + $0x70] sm:$0xff] %vm636, -inf
        %652 = vst.msk [vmem:[#allocation3 + $0x78] sm:$0xff] %vm636, -inf
        %653 = vst.msk [vmem:[#allocation4] sm:$0xff] %vm636, 0.0
        %654 = vst.msk [vmem:[#allocation4 + $0x8] sm:$0xff] %vm636, 0.0
        %655 = vst.msk [vmem:[#allocation4 + $0x10] sm:$0xff] %vm636, 0.0
        %656 = vst.msk [vmem:[#allocation4 + $0x18] sm:$0xff] %vm636, 0.0
        %657 = vst.msk [vmem:[#allocation4 + $0x20] sm:$0xff] %vm636, 0.0
        %658 = vst.msk [vmem:[#allocation4 + $0x28] sm:$0xff] %vm636, 0.0
        %659 = vst.msk [vmem:[#allocation4 + $0x30] sm:$0xff] %vm636, 0.0
        %660 = vst.msk [vmem:[#allocation4 + $0x38] sm:$0xff] %vm636, 0.0
        %661 = vst.msk [vmem:[#allocation4 + $0x40] sm:$0xff] %vm636, 0.0
        %662 = vst.msk [vmem:[#allocation4 + $0x48] sm:$0xff] %vm636, 0.0
        %663 = vst.msk [vmem:[#allocation4 + $0x50] sm:$0xff] %vm636, 0.0
        %664 = vst.msk [vmem:[#allocation4 + $0x58] sm:$0xff] %vm636, 0.0
        %665 = vst.msk [vmem:[#allocation4 + $0x60] sm:$0xff] %vm636, 0.0
        %666 = vst.msk [vmem:[#allocation4 + $0x68] sm:$0xff] %vm636, 0.0
        %667 = vst.msk [vmem:[#allocation4 + $0x70] sm:$0xff] %vm636, 0.0
        %668 = vst.msk [vmem:[#allocation4 + $0x78] sm:$0xff] %vm636, 0.0
        %669 = vst [vmem:[#allocation5] sm:$0xff] 0.0
        %670 = vst [vmem:[#allocation5 + $0x8] sm:$0xff] 0.0
        %671 = vst [vmem:[#allocation5 + $0x10] sm:$0xff] 0.0
        %672 = vst [vmem:[#allocation5 + $0x18] sm:$0xff] 0.0
        %673 = vst [vmem:[#allocation5 + $0x20] sm:$0xff] 0.0
        %674 = vst [vmem:[#allocation5 + $0x28] sm:$0xff] 0.0
        %675 = vst [vmem:[#allocation5 + $0x30] sm:$0xff] 0.0
        %676 = vst [vmem:[#allocation5 + $0x38] sm:$0xff] 0.0
        %677 = vst [vmem:[#allocation5 + $0x40] sm:$0xff] 0.0
        %678 = vst [vmem:[#allocation5 + $0x48] sm:$0xff] 0.0
        %679 = vst [vmem:[#allocation5 + $0x50] sm:$0xff] 0.0
        %680 = vst [vmem:[#allocation5 + $0x58] sm:$0xff] 0.0
        %681 = vst [vmem:[#allocation5 + $0x60] sm:$0xff] 0.0
        %682 = vst [vmem:[#allocation5 + $0x68] sm:$0xff] 0.0
        %683 = vst [vmem:[#allocation5 + $0x70] sm:$0xff] 0.0
        %684 = vst [vmem:[#allocation5 + $0x78] sm:$0xff] 0.0
      $region44: #{attention_layer.3} parent=39 // pred_fallthru
        _
      %v685 = vld [vmem:[%s368] sm:$0xf]
      %v686 = vld [vmem:[%s368 + $0x4] sm:$0xf]
      %v687 = vld [vmem:[%s368 + $0x8] sm:$0xf]
      %v688 = vld [vmem:[%s368 + $0xc] sm:$0xf]
      %v689 = vld [vmem:[%s368 + $0x10] sm:$0xf]
      %v690 = vld [vmem:[%s368 + $0x14] sm:$0xf]
      %v691 = vld [vmem:[%s368 + $0x18] sm:$0xf]
      %v692 = vld [vmem:[%s368 + $0x1c] sm:$0xf]
      %v693 = vld [vmem:[%s368 + $0x20] sm:$0xf]
      %v694 = vld [vmem:[%s368 + $0x24] sm:$0xf]
      %v695 = vld [vmem:[%s368 + $0x28] sm:$0xf]
      %v696 = vld [vmem:[%s368 + $0x2c] sm:$0xf]
      %v697 = vld [vmem:[%s368 + $0x30] sm:$0xf]
      %v698 = vld [vmem:[%s368 + $0x34] sm:$0xf]
      %v699 = vld [vmem:[%s368 + $0x38] sm:$0xf]
      %v700 = vld [vmem:[%s368 + $0x3c] sm:$0xf]
      %v701 = vld [vmem:[%s378] sm:$0xf]
      %v702 = vld [vmem:[%s378 + $0x4] sm:$0xf]
      %v703 = vld [vmem:[%s378 + $0x8] sm:$0xf]
      %v704 = vld [vmem:[%s378 + $0xc] sm:$0xf]
      %v705 = vld [vmem:[%s378 + $0x10] sm:$0xf]
      %v706 = vld [vmem:[%s378 + $0x14] sm:$0xf]
      %v707 = vld [vmem:[%s378 + $0x18] sm:$0xf]
      %v708 = vld [vmem:[%s378 + $0x1c] sm:$0xf]
      %v709 = vld [vmem:[%s378 + $0x20] sm:$0xf]
      %v710 = vld [vmem:[%s378 + $0x24] sm:$0xf]
      %v711 = vld [vmem:[%s378 + $0x28] sm:$0xf]
      %v712 = vld [vmem:[%s378 + $0x2c] sm:$0xf]
      %v713 = vld [vmem:[%s378 + $0x30] sm:$0xf]
      %v714 = vld [vmem:[%s378 + $0x34] sm:$0xf]
      %v715 = vld [vmem:[%s378 + $0x38] sm:$0xf]
      %v716 = vld [vmem:[%s378 + $0x3c] sm:$0xf]
      %v717 = vld [vmem:[#allocation2] sm:$0xff]
      %v718 = vld [vmem:[#allocation2 + $0x8] sm:$0xff]
      %v719 = vld [vmem:[#allocation2 + $0x10] sm:$0xff]
      %v720 = vld [vmem:[#allocation2 + $0x18] sm:$0xff]
      %v721 = vld [vmem:[#allocation2 + $0x20] sm:$0xff]
      %v722 = vld [vmem:[#allocation2 + $0x28] sm:$0xff]
      %v723 = vld [vmem:[#allocation2 + $0x30] sm:$0xff]
      %v724 = vld [vmem:[#allocation2 + $0x38] sm:$0xff]
      %v741 = vunpack.c.l.b16 %v685
      %v742 = vunpack.c.l.b16 %v686
      %v743 = vunpack.c.l.b16 %v687
      %v744 = vunpack.c.l.b16 %v688
      %v745 = vunpack.c.l.b16 %v689
      %v746 = vunpack.c.l.b16 %v690
      %v747 = vunpack.c.l.b16 %v691
      %v748 = vunpack.c.l.b16 %v692
      %v749 = vunpack.c.l.b16 %v693
      %v750 = vunpack.c.l.b16 %v694
      %v751 = vunpack.c.l.b16 %v695
      %v752 = vunpack.c.l.b16 %v696
      %v753 = vunpack.c.l.b16 %v697
      %v754 = vunpack.c.l.b16 %v698
      %v755 = vunpack.c.l.b16 %v699
      %v756 = vunpack.c.l.b16 %v700
      %v757 = vpack.c.b16 %v742, %v741
      %v758 = vpack.c.b16 %v744, %v743
      %v759 = vpack.c.b16 %v746, %v745
      %v760 = vpack.c.b16 %v748, %v747
      %v761 = vpack.c.b16 %v750, %v749
      %v762 = vpack.c.b16 %v752, %v751
      %v763 = vpack.c.b16 %v754, %v753
      %v764 = vpack.c.b16 %v756, %v755
      %773 = vmatprep.subr.bf16.mxu0 0
      %774 = vmatpush1.bf16.xpose.msra.mxu0 %v757
      %775 = vmatprep.subr.bf16.mxu0 0
      %776 = vmatpush1.bf16.xpose.msra.mxu0 %v758
      %777 = vmatprep.subr.bf16.mxu0 0
      %778 = vmatpush1.bf16.xpose.msra.mxu0 %v759
      %779 = vmatprep.subr.bf16.mxu0 0
      %780 = vmatpush1.bf16.xpose.msra.mxu0 %v760
      %781 = vmatprep.subr.bf16.mxu0 0
      %782 = vmatpush1.bf16.xpose.msra.mxu0 %v761
      %783 = vmatprep.subr.bf16.mxu0 0
      %784 = vmatpush1.bf16.xpose.msra.mxu0 %v762
      %785 = vmatprep.subr.bf16.mxu0 0
      %786 = vmatpush1.bf16.xpose.msra.mxu0 %v763
      %787 = vmatprep.subr.bf16.mxu0 0
      %788 = vmatpush1.bf16.xpose.msra.mxu0 %v764
      %789 = vmatprep.subr.bf16.mxu0 0
      %790 = vmatpush1.bf16.xpose.msra.mxu0 0
      %791 = vmatprep.subr.bf16.mxu0 0
      %792 = vmatpush1.bf16.xpose.msra.mxu0 0
      %793 = vmatprep.subr.bf16.mxu0 0
      %794 = vmatpush1.bf16.xpose.msra.mxu0 0
      %795 = vmatprep.subr.bf16.mxu0 0
      %796 = vmatpush1.bf16.xpose.msra.mxu0 0
      %797 = vmatprep.subr.bf16.mxu0 0
      %798 = vmatpush1.bf16.xpose.msra.mxu0 0
      %799 = vmatprep.subr.bf16.mxu0 0
      %800 = vmatpush1.bf16.xpose.msra.mxu0 0
      %801 = vmatprep.subr.bf16.mxu0 0
      %802 = vmatpush1.bf16.xpose.msra.mxu0 0
      %803 = vmatprep.subr.bf16.mxu0 0
      %804 = vmatpush1.bf16.xpose.msra.mxu0 0
      %805 = vmatprep.mubr.bf16.mxu0 0
      %806 = vmatmul.mubr.bf16.gmra.mrb[0].mxu0 %v717
      %v807 = vpop.f32.mrb[0].mxu0
      %v808 = vadd.f32 0.0, %v807
      %v809 = vpop.f32.mrb[0].mxu0
      %v810 = vpop.f32.mrb[0].mxu0
      %v811 = vadd.f32 0.0, %v810
      %v812 = vpop.f32.mrb[0].mxu0
      %813 = vmatprep.mubr.bf16.mxu0 0
      %814 = vmatmul.mubr.bf16.gmra.mrb[0].mxu0 %v718
      %v815 = vpop.f32.mrb[0].mxu0
      %v816 = vadd.f32 0.0, %v815
      %v817 = vpop.f32.mrb[0].mxu0
      %v818 = vpop.f32.mrb[0].mxu0
      %v819 = vadd.f32 0.0, %v818
      %v820 = vpop.f32.mrb[0].mxu0
      %821 = vmatprep.mubr.bf16.mxu0 0
      %822 = vmatmul.mubr.bf16.gmra.mrb[0].mxu0 %v719
      %v823 = vpop.f32.mrb[0].mxu0
      %v824 = vadd.f32 0.0, %v823
      %v825 = vpop.f32.mrb[0].mxu0
      %v826 = vpop.f32.mrb[0].mxu0
      %v827 = vadd.f32 0.0, %v826
      %v828 = vpop.f32.mrb[0].mxu0
      %829 = vmatprep.mubr.bf16.mxu0 0
      %830 = vmatmul.mubr.bf16.gmra.mrb[0].mxu0 %v720
      %v831 = vpop.f32.mrb[0].mxu0
      %v832 = vadd.f32 0.0, %v831
      %v833 = vpop.f32.mrb[0].mxu0
      %v834 = vpop.f32.mrb[0].mxu0
      %v835 = vadd.f32 0.0, %v834
      %v836 = vpop.f32.mrb[0].mxu0
      %837 = vmatprep.mubr.bf16.mxu0 0
      %838 = vmatmul.mubr.bf16.gmra.mrb[0].mxu0 %v721
      %v839 = vpop.f32.mrb[0].mxu0
      %v840 = vadd.f32 0.0, %v839
      %v841 = vpop.f32.mrb[0].mxu0
      %v842 = vpop.f32.mrb[0].mxu0
      %v843 = vadd.f32 0.0, %v842
      %v844 = vpop.f32.mrb[0].mxu0
      %845 = vmatprep.mubr.bf16.mxu0 0
      %846 = vmatmul.mubr.bf16.gmra.mrb[0].mxu0 %v722
      %v847 = vpop.f32.mrb[0].mxu0
      %v848 = vadd.f32 0.0, %v847
      %v849 = vpop.f32.mrb[0].mxu0
      %v850 = vpop.f32.mrb[0].mxu0
      %v851 = vadd.f32 0.0, %v850
      %v852 = vpop.f32.mrb[0].mxu0
      %853 = vmatprep.mubr.bf16.mxu0 0
      %854 = vmatmul.mubr.bf16.gmra.mrb[0].mxu0 %v723
      %v855 = vpop.f32.mrb[0].mxu0
      %v856 = vadd.f32 0.0, %v855
      %v857 = vpop.f32.mrb[0].mxu0
      %v858 = vpop.f32.mrb[0].mxu0
      %v859 = vadd.f32 0.0, %v858
      %v860 = vpop.f32.mrb[0].mxu0
      %861 = vmatprep.mubr.bf16.mxu0 0
      %862 = vmatmul.mubr.bf16.gmra.mrb[0].mxu0 %v724
      %v863 = vpop.f32.mrb[0].mxu0
      %v864 = vadd.f32 0.0, %v863
      %v865 = vpop.f32.mrb[0].mxu0
      %v866 = vpop.f32.mrb[0].mxu0
      %v867 = vadd.f32 0.0, %v866
      %v868 = vpop.f32.mrb[0].mxu0
      %869 = vdwg.mxu0
      %v870 = vld [vmem:[%s358] sm:$0xff]
      %v871 = vld [vmem:[%s358 + $0x8] sm:$0xff]
      %v872 = vld [vmem:[%s358 + $0x10] sm:$0xff]
      %v873 = vld [vmem:[%s358 + $0x18] sm:$0xff]
      %v874 = vunpack.c.0.s8 %v870
      %v875 = vunpack.c.1.s8 %v870
      %v876 = vunpack.c.2.s8 %v870
      %v877 = vunpack.c.3.s8 %v870
      %v878 = vunpack.c.0.s8 %v871
      %v879 = vunpack.c.1.s8 %v871
      %v880 = vunpack.c.2.s8 %v871
      %v881 = vunpack.c.3.s8 %v871
      %v882 = vunpack.c.0.s8 %v872
      %v883 = vunpack.c.1.s8 %v872
      %v884 = vunpack.c.2.s8 %v872
      %v885 = vunpack.c.3.s8 %v872
      %v886 = vunpack.c.0.s8 %v873
      %v887 = vunpack.c.1.s8 %v873
      %v888 = vunpack.c.2.s8 %v873
      %v889 = vunpack.c.3.s8 %v873
      %v890 = vcvt.s32.f32 %v874
      %v891 = vcvt.s32.f32 %v875
      %v892 = vcvt.s32.f32 %v876
      %v893 = vcvt.s32.f32 %v877
      %v894 = vcvt.s32.f32 %v878
      %v895 = vcvt.s32.f32 %v879
      %v896 = vcvt.s32.f32 %v880
      %v897 = vcvt.s32.f32 %v881
      %v898 = vcvt.s32.f32 %v882
      %v899 = vcvt.s32.f32 %v883
      %v900 = vcvt.s32.f32 %v884
      %v901 = vcvt.s32.f32 %v885
      %v902 = vcvt.s32.f32 %v886
      %v903 = vcvt.s32.f32 %v887
      %v904 = vcvt.s32.f32 %v888
      %v905 = vcvt.s32.f32 %v889
      %vm906 = vcmp.gt.f32.partialorder %v890, 0.0
      %vm907 = vcmp.gt.f32.partialorder %v891, 0.0
      %vm908 = vcmp.gt.f32.partialorder %v892, 0.0
      %vm909 = vcmp.gt.f32.partialorder %v893, 0.0
      %vm910 = vcmp.gt.f32.partialorder %v894, 0.0
      %vm911 = vcmp.gt.f32.partialorder %v895, 0.0
      %vm912 = vcmp.gt.f32.partialorder %v896, 0.0
      %vm913 = vcmp.gt.f32.partialorder %v897, 0.0
      %vm914 = vcmp.gt.f32.partialorder %v898, 0.0
      %vm915 = vcmp.gt.f32.partialorder %v899, 0.0
      %vm916 = vcmp.gt.f32.partialorder %v900, 0.0
      %vm917 = vcmp.gt.f32.partialorder %v901, 0.0
      %vm918 = vcmp.gt.f32.partialorder %v902, 0.0
      %vm919 = vcmp.gt.f32.partialorder %v903, 0.0
      %vm920 = vcmp.gt.f32.partialorder %v904, 0.0
      %vm921 = vcmp.gt.f32.partialorder %v905, 0.0
      %v922 = vsel %vm906, -1e+09, %v808
      %v923 = vsel %vm907, -1e+09, %v811
      %v924 = vsel %vm908, -1e+09, %v816
      %v925 = vsel %vm909, -1e+09, %v819
      %v926 = vsel %vm910, -1e+09, %v824
      %v927 = vsel %vm911, -1e+09, %v827
      %v928 = vsel %vm912, -1e+09, %v832
      %v929 = vsel %vm913, -1e+09, %v835
      %v930 = vsel %vm914, -1e+09, %v840
      %v931 = vsel %vm915, -1e+09, %v843
      %v932 = vsel %vm916, -1e+09, %v848
      %v933 = vsel %vm917, -1e+09, %v851
      %v934 = vsel %vm918, -1e+09, %v856
      %v935 = vsel %vm919, -1e+09, %v859
      %v936 = vsel %vm920, -1e+09, %v864
      %v937 = vsel %vm921, -1e+09, %v867
      %v938 = vld [vmem:[#allocation3] sm:$0xff]
      %v939 = vld [vmem:[#allocation3 + $0x8] sm:$0xff]
      %v940 = vld [vmem:[#allocation3 + $0x10] sm:$0xff]
      %v941 = vld [vmem:[#allocation3 + $0x18] sm:$0xff]
      %v942 = vld [vmem:[#allocation3 + $0x20] sm:$0xff]
      %v943 = vld [vmem:[#allocation3 + $0x28] sm:$0xff]
      %v944 = vld [vmem:[#allocation3 + $0x30] sm:$0xff]
      %v945 = vld [vmem:[#allocation3 + $0x38] sm:$0xff]
      %v946 = vld [vmem:[#allocation3 + $0x40] sm:$0xff]
      %v947 = vld [vmem:[#allocation3 + $0x48] sm:$0xff]
      %v948 = vld [vmem:[#allocation3 + $0x50] sm:$0xff]
      %v949 = vld [vmem:[#allocation3 + $0x58] sm:$0xff]
      %v950 = vld [vmem:[#allocation3 + $0x60] sm:$0xff]
      %v951 = vld [vmem:[#allocation3 + $0x68] sm:$0xff]
      %v952 = vld [vmem:[#allocation3 + $0x70] sm:$0xff]
      %v953 = vld [vmem:[#allocation3 + $0x78] sm:$0xff]
      %954 = vmax.xlane.f32.xlu0 %v922
      %v955 = vpop.xlane.xlu0 %954
      %956 = vmax.xlane.f32.xlu0 %v923
      %v957 = vpop.xlane.xlu0 %956
      %958 = vmax.xlane.f32.xlu0 %v924
      %v959 = vpop.xlane.xlu0 %958
      %960 = vmax.xlane.f32.xlu0 %v925
      %v961 = vpop.xlane.xlu0 %960
      %962 = vmax.xlane.f32.xlu0 %v926
      %v963 = vpop.xlane.xlu0 %962
      %964 = vmax.xlane.f32.xlu0 %v927
      %v965 = vpop.xlane.xlu0 %964
      %966 = vmax.xlane.f32.xlu0 %v928
      %v967 = vpop.xlane.xlu0 %966
      %968 = vmax.xlane.f32.xlu0 %v929
      %v969 = vpop.xlane.xlu0 %968
      %970 = vmax.xlane.f32.xlu0 %v930
      %v971 = vpop.xlane.xlu0 %970
      %972 = vmax.xlane.f32.xlu0 %v931
      %v973 = vpop.xlane.xlu0 %972
      %974 = vmax.xlane.f32.xlu0 %v932
      %v975 = vpop.xlane.xlu0 %974
      %976 = vmax.xlane.f32.xlu0 %v933
      %v977 = vpop.xlane.xlu0 %976
      %978 = vmax.xlane.f32.xlu0 %v934
      %v979 = vpop.xlane.xlu0 %978
      %980 = vmax.xlane.f32.xlu0 %v935
      %v981 = vpop.xlane.xlu0 %980
      %982 = vmax.xlane.f32.xlu0 %v936
      %v983 = vpop.xlane.xlu0 %982
      %984 = vmax.xlane.f32.xlu0 %v937
      %v985 = vpop.xlane.xlu0 %984
      %v986 = vmax.f32 %v938, %v955
      %v987 = vmax.f32 %v939, %v957
      %v988 = vmax.f32 %v940, %v959
      %v989 = vmax.f32 %v941, %v961
      %v990 = vmax.f32 %v942, %v963
      %v991 = vmax.f32 %v943, %v965
      %v992 = vmax.f32 %v944, %v967
      %v993 = vmax.f32 %v945, %v969
      %v994 = vmax.f32 %v946, %v971
      %v995 = vmax.f32 %v947, %v973
      %v996 = vmax.f32 %v948, %v975
      %v997 = vmax.f32 %v949, %v977
      %v998 = vmax.f32 %v950, %v979
      %v999 = vmax.f32 %v951, %v981
      %v1000 = vmax.f32 %v952, %v983
      %v1001 = vmax.f32 %v953, %v985
      %v1002 = vsub.f32 %v938, %v986
      %v1003 = vsub.f32 %v939, %v987
      %v1004 = vsub.f32 %v940, %v988
      %v1005 = vsub.f32 %v941, %v989
      %v1006 = vsub.f32 %v942, %v990
      %v1007 = vsub.f32 %v943, %v991
      %v1008 = vsub.f32 %v944, %v992
      %v1009 = vsub.f32 %v945, %v993
      %v1010 = vsub.f32 %v946, %v994
      %v1011 = vsub.f32 %v947, %v995
      %v1012 = vsub.f32 %v948, %v996
      %v1013 = vsub.f32 %v949, %v997
      %v1014 = vsub.f32 %v950, %v998
      %v1015 = vsub.f32 %v951, %v999
      %v1016 = vsub.f32 %v952, %v1000
      %v1017 = vsub.f32 %v953, %v1001
      %v1018 = vmul.f32 %v1002, 1.442695
      %v1019 = vpow.pop %v1018
      %v1020 = vmul.f32 %v1003, 1.442695
      %v1021 = vpow.pop %v1020
      %v1022 = vmul.f32 %v1004, 1.442695
      %v1023 = vpow.pop %v1022
      %v1024 = vmul.f32 %v1005, 1.442695
      %v1025 = vpow.pop %v1024
      %v1026 = vmul.f32 %v1006, 1.442695
      %v1027 = vpow.pop %v1026
      %v1028 = vmul.f32 %v1007, 1.442695
      %v1029 = vpow.pop %v1028
      %v1030 = vmul.f32 %v1008, 1.442695
      %v1031 = vpow.pop %v1030
      %v1032 = vmul.f32 %v1009, 1.442695
      %v1033 = vpow.pop %v1032
      %v1034 = vmul.f32 %v1010, 1.442695
      %v1035 = vpow.pop %v1034
      %v1036 = vmul.f32 %v1011, 1.442695
      %v1037 = vpow.pop %v1036
      %v1038 = vmul.f32 %v1012, 1.442695
      %v1039 = vpow.pop %v1038
      %v1040 = vmul.f32 %v1013, 1.442695
      %v1041 = vpow.pop %v1040
      %v1042 = vmul.f32 %v1014, 1.442695
      %v1043 = vpow.pop %v1042
      %v1044 = vmul.f32 %v1015, 1.442695
      %v1045 = vpow.pop %v1044
      %v1046 = vmul.f32 %v1016, 1.442695
      %v1047 = vpow.pop %v1046
      %v1048 = vmul.f32 %v1017, 1.442695
      %v1049 = vpow.pop %v1048
      %1051 = vset.pattern.permute.xlu0 0
      %1052 = vperm.xlu0 %1051, %v986
      %v1053 = vpop.permute.xlu0 %1052
      %1056 = vset.pattern.permute.xlu0 0
      %1057 = vperm.xlu0 %1056, %v987
      %v1058 = vpop.permute.xlu0 %1057
      %1061 = vset.pattern.permute.xlu0 0
      %1062 = vperm.xlu0 %1061, %v988
      %v1063 = vpop.permute.xlu0 %1062
      %1066 = vset.pattern.permute.xlu0 0
      %1067 = vperm.xlu0 %1066, %v989
      %v1068 = vpop.permute.xlu0 %1067
      %1071 = vset.pattern.permute.xlu0 0
      %1072 = vperm.xlu0 %1071, %v990
      %v1073 = vpop.permute.xlu0 %1072
      %1076 = vset.pattern.permute.xlu0 0
      %1077 = vperm.xlu0 %1076, %v991
      %v1078 = vpop.permute.xlu0 %1077
      %1081 = vset.pattern.permute.xlu0 0
      %1082 = vperm.xlu0 %1081, %v992
      %v1083 = vpop.permute.xlu0 %1082
      %1086 = vset.pattern.permute.xlu0 0
      %1087 = vperm.xlu0 %1086, %v993
      %v1088 = vpop.permute.xlu0 %1087
      %1091 = vset.pattern.permute.xlu0 0
      %1092 = vperm.xlu0 %1091, %v994
      %v1093 = vpop.permute.xlu0 %1092
      %1096 = vset.pattern.permute.xlu0 0
      %1097 = vperm.xlu0 %1096, %v995
      %v1098 = vpop.permute.xlu0 %1097
      %1101 = vset.pattern.permute.xlu0 0
      %1102 = vperm.xlu0 %1101, %v996
      %v1103 = vpop.permute.xlu0 %1102
      %1106 = vset.pattern.permute.xlu0 0
      %1107 = vperm.xlu0 %1106, %v997
      %v1108 = vpop.permute.xlu0 %1107
      %1111 = vset.pattern.permute.xlu0 0
      %1112 = vperm.xlu0 %1111, %v998
      %v1113 = vpop.permute.xlu0 %1112
      %1116 = vset.pattern.permute.xlu0 0
      %1117 = vperm.xlu0 %1116, %v999
      %v1118 = vpop.permute.xlu0 %1117
      %1121 = vset.pattern.permute.xlu0 0
      %1122 = vperm.xlu0 %1121, %v1000
      %v1123 = vpop.permute.xlu0 %1122
      %1126 = vset.pattern.permute.xlu0 0
      %1127 = vperm.xlu0 %1126, %v1001
      %v1128 = vpop.permute.xlu0 %1127
      %v1130 = vsub.f32 %v922, %v1053
      %v1131 = vsub.f32 %v923, %v1058
      %v1132 = vsub.f32 %v924, %v1063
      %v1133 = vsub.f32 %v925, %v1068
      %v1134 = vsub.f32 %v926, %v1073
      %v1135 = vsub.f32 %v927, %v1078
      %v1136 = vsub.f32 %v928, %v1083
      %v1137 = vsub.f32 %v929, %v1088
      %v1138 = vsub.f32 %v930, %v1093
      %v1139 = vsub.f32 %v931, %v1098
      %v1140 = vsub.f32 %v932, %v1103
      %v1141 = vsub.f32 %v933, %v1108
      %v1142 = vsub.f32 %v934, %v1113
      %v1143 = vsub.f32 %v935, %v1118
      %v1144 = vsub.f32 %v936, %v1123
      %v1145 = vsub.f32 %v937, %v1128
      %v1146 = vmul.f32 %v1130, 1.442695
      %v1147 = vpow.pop %v1146
      %v1148 = vmul.f32 %v1131, 1.442695
      %v1149 = vpow.pop %v1148
      %v1150 = vmul.f32 %v1132, 1.442695
      %v1151 = vpow.pop %v1150
      %v1152 = vmul.f32 %v1133, 1.442695
      %v1153 = vpow.pop %v1152
      %v1154 = vmul.f32 %v1134, 1.442695
      %v1155 = vpow.pop %v1154
      %v1156 = vmul.f32 %v1135, 1.442695
      %v1157 = vpow.pop %v1156
      %v1158 = vmul.f32 %v1136, 1.442695
      %v1159 = vpow.pop %v1158
      %v1160 = vmul.f32 %v1137, 1.442695
      %v1161 = vpow.pop %v1160
      %v1162 = vmul.f32 %v1138, 1.442695
      %v1163 = vpow.pop %v1162
      %v1164 = vmul.f32 %v1139, 1.442695
      %v1165 = vpow.pop %v1164
      %v1166 = vmul.f32 %v1140, 1.442695
      %v1167 = vpow.pop %v1166
      %v1168 = vmul.f32 %v1141, 1.442695
      %v1169 = vpow.pop %v1168
      %v1170 = vmul.f32 %v1142, 1.442695
      %v1171 = vpow.pop %v1170
      %v1172 = vmul.f32 %v1143, 1.442695
      %v1173 = vpow.pop %v1172
      %v1174 = vmul.f32 %v1144, 1.442695
      %v1175 = vpow.pop %v1174
      %v1176 = vmul.f32 %v1145, 1.442695
      %v1177 = vpow.pop %v1176
      %v1178 = vld [vmem:[#allocation4] sm:$0xff]
      %v1179 = vld [vmem:[#allocation4 + $0x8] sm:$0xff]
      %v1180 = vld [vmem:[#allocation4 + $0x10] sm:$0xff]
      %v1181 = vld [vmem:[#allocation4 + $0x18] sm:$0xff]
      %v1182 = vld [vmem:[#allocation4 + $0x20] sm:$0xff]
      %v1183 = vld [vmem:[#allocation4 + $0x28] sm:$0xff]
      %v1184 = vld [vmem:[#allocation4 + $0x30] sm:$0xff]
      %v1185 = vld [vmem:[#allocation4 + $0x38] sm:$0xff]
      %v1186 = vld [vmem:[#allocation4 + $0x40] sm:$0xff]
      %v1187 = vld [vmem:[#allocation4 + $0x48] sm:$0xff]
      %v1188 = vld [vmem:[#allocation4 + $0x50] sm:$0xff]
      %v1189 = vld [vmem:[#allocation4 + $0x58] sm:$0xff]
      %v1190 = vld [vmem:[#allocation4 + $0x60] sm:$0xff]
      %v1191 = vld [vmem:[#allocation4 + $0x68] sm:$0xff]
      %v1192 = vld [vmem:[#allocation4 + $0x70] sm:$0xff]
      %v1193 = vld [vmem:[#allocation4 + $0x78] sm:$0xff]
      %v1194 = vmul.f32 %v1019, %v1178
      %v1195 = vmul.f32 %v1021, %v1179
      %v1196 = vmul.f32 %v1023, %v1180
      %v1197 = vmul.f32 %v1025, %v1181
      %v1198 = vmul.f32 %v1027, %v1182
      %v1199 = vmul.f32 %v1029, %v1183
      %v1200 = vmul.f32 %v1031, %v1184
      %v1201 = vmul.f32 %v1033, %v1185
      %v1202 = vmul.f32 %v1035, %v1186
      %v1203 = vmul.f32 %v1037, %v1187
      %v1204 = vmul.f32 %v1039, %v1188
      %v1205 = vmul.f32 %v1041, %v1189
      %v1206 = vmul.f32 %v1043, %v1190
      %v1207 = vmul.f32 %v1045, %v1191
      %v1208 = vmul.f32 %v1047, %v1192
      %v1209 = vmul.f32 %v1049, %v1193
      %1210 = vadd.xlane.f32.xlu0 %v1147
      %v1211 = vpop.xlane.xlu0 %1210
      %1212 = vadd.xlane.f32.xlu0 %v1149
      %v1213 = vpop.xlane.xlu0 %1212
      %1214 = vadd.xlane.f32.xlu0 %v1151
      %v1215 = vpop.xlane.xlu0 %1214
      %1216 = vadd.xlane.f32.xlu0 %v1153
      %v1217 = vpop.xlane.xlu0 %1216
      %1218 = vadd.xlane.f32.xlu0 %v1155
      %v1219 = vpop.xlane.xlu0 %1218
      %1220 = vadd.xlane.f32.xlu0 %v1157
      %v1221 = vpop.xlane.xlu0 %1220
      %1222 = vadd.xlane.f32.xlu0 %v1159
      %v1223 = vpop.xlane.xlu0 %1222
      %1224 = vadd.xlane.f32.xlu0 %v1161
      %v1225 = vpop.xlane.xlu0 %1224
      %1226 = vadd.xlane.f32.xlu0 %v1163
      %v1227 = vpop.xlane.xlu0 %1226
      %1228 = vadd.xlane.f32.xlu0 %v1165
      %v1229 = vpop.xlane.xlu0 %1228
      %1230 = vadd.xlane.f32.xlu0 %v1167
      %v1231 = vpop.xlane.xlu0 %1230
      %1232 = vadd.xlane.f32.xlu0 %v1169
      %v1233 = vpop.xlane.xlu0 %1232
      %1234 = vadd.xlane.f32.xlu0 %v1171
      %v1235 = vpop.xlane.xlu0 %1234
      %1236 = vadd.xlane.f32.xlu0 %v1173
      %v1237 = vpop.xlane.xlu0 %1236
      %1238 = vadd.xlane.f32.xlu0 %v1175
      %v1239 = vpop.xlane.xlu0 %1238
      %1240 = vadd.xlane.f32.xlu0 %v1177
      %v1241 = vpop.xlane.xlu0 %1240
      %v1242 = vadd.f32 %v1194, %v1211
      %v1243 = vadd.f32 %v1195, %v1213
      %v1244 = vadd.f32 %v1196, %v1215
      %v1245 = vadd.f32 %v1197, %v1217
      %v1246 = vadd.f32 %v1198, %v1219
      %v1247 = vadd.f32 %v1199, %v1221
      %v1248 = vadd.f32 %v1200, %v1223
      %v1249 = vadd.f32 %v1201, %v1225
      %v1250 = vadd.f32 %v1202, %v1227
      %v1251 = vadd.f32 %v1203, %v1229
      %v1252 = vadd.f32 %v1204, %v1231
      %v1253 = vadd.f32 %v1205, %v1233
      %v1254 = vadd.f32 %v1206, %v1235
      %v1255 = vadd.f32 %v1207, %v1237
      %v1256 = vadd.f32 %v1208, %v1239
      %v1257 = vadd.f32 %v1209, %v1241
      %vm1258 = vcmask 7168
      %1259 = vst.msk [vmem:[#allocation4] sm:$0xff] %vm1258, %v1242
      %1260 = vst.msk [vmem:[#allocation4 + $0x8] sm:$0xff] %vm1258, %v1243
      %1261 = vst.msk [vmem:[#allocation4 + $0x10] sm:$0xff] %vm1258, %v1244
      %1262 = vst.msk [vmem:[#allocation4 + $0x18] sm:$0xff] %vm1258, %v1245
      %1263 = vst.msk [vmem:[#allocation4 + $0x20] sm:$0xff] %vm1258, %v1246
      %1264 = vst.msk [vmem:[#allocation4 + $0x28] sm:$0xff] %vm1258, %v1247
      %1265 = vst.msk [vmem:[#allocation4 + $0x30] sm:$0xff] %vm1258, %v1248
      %1266 = vst.msk [vmem:[#allocation4 + $0x38] sm:$0xff] %vm1258, %v1249
      %1267 = vst.msk [vmem:[#allocation4 + $0x40] sm:$0xff] %vm1258, %v1250
      %1268 = vst.msk [vmem:[#allocation4 + $0x48] sm:$0xff] %vm1258, %v1251
      %1269 = vst.msk [vmem:[#allocation4 + $0x50] sm:$0xff] %vm1258, %v1252
      %1270 = vst.msk [vmem:[#allocation4 + $0x58] sm:$0xff] %vm1258, %v1253
      %1271 = vst.msk [vmem:[#allocation4 + $0x60] sm:$0xff] %vm1258, %v1254
      %1272 = vst.msk [vmem:[#allocation4 + $0x68] sm:$0xff] %vm1258, %v1255
      %1273 = vst.msk [vmem:[#allocation4 + $0x70] sm:$0xff] %vm1258, %v1256
      %1274 = vst.msk [vmem:[#allocation4 + $0x78] sm:$0xff] %vm1258, %v1257
      %v1275 = vld [vmem:[#allocation5] sm:$0xff]
      %v1276 = vld [vmem:[#allocation5 + $0x8] sm:$0xff]
      %v1277 = vld [vmem:[#allocation5 + $0x10] sm:$0xff]
      %v1278 = vld [vmem:[#allocation5 + $0x18] sm:$0xff]
      %v1279 = vld [vmem:[#allocation5 + $0x20] sm:$0xff]
      %v1280 = vld [vmem:[#allocation5 + $0x28] sm:$0xff]
      %v1281 = vld [vmem:[#allocation5 + $0x30] sm:$0xff]
      %v1282 = vld [vmem:[#allocation5 + $0x38] sm:$0xff]
      %v1283 = vld [vmem:[#allocation5 + $0x40] sm:$0xff]
      %v1284 = vld [vmem:[#allocation5 + $0x48] sm:$0xff]
      %v1285 = vld [vmem:[#allocation5 + $0x50] sm:$0xff]
      %v1286 = vld [vmem:[#allocation5 + $0x58] sm:$0xff]
      %v1287 = vld [vmem:[#allocation5 + $0x60] sm:$0xff]
      %v1288 = vld [vmem:[#allocation5 + $0x68] sm:$0xff]
      %v1289 = vld [vmem:[#allocation5 + $0x70] sm:$0xff]
      %v1290 = vld [vmem:[#allocation5 + $0x78] sm:$0xff]
      %1292 = vset.pattern.permute.xlu0 0
      %1293 = vperm.xlu0 %1292, %v1019
      %v1294 = vpop.permute.xlu0 %1293
      %1297 = vset.pattern.permute.xlu0 0
      %1298 = vperm.xlu0 %1297, %v1021
      %v1299 = vpop.permute.xlu0 %1298
      %1302 = vset.pattern.permute.xlu0 0
      %1303 = vperm.xlu0 %1302, %v1023
      %v1304 = vpop.permute.xlu0 %1303
      %1307 = vset.pattern.permute.xlu0 0
      %1308 = vperm.xlu0 %1307, %v1025
      %v1309 = vpop.permute.xlu0 %1308
      %1312 = vset.pattern.permute.xlu0 0
      %1313 = vperm.xlu0 %1312, %v1027
      %v1314 = vpop.permute.xlu0 %1313
      %1317 = vset.pattern.permute.xlu0 0
      %1318 = vperm.xlu0 %1317, %v1029
      %v1319 = vpop.permute.xlu0 %1318
      %1322 = vset.pattern.permute.xlu0 0
      %1323 = vperm.xlu0 %1322, %v1031
      %v1324 = vpop.permute.xlu0 %1323
      %1327 = vset.pattern.permute.xlu0 0
      %1328 = vperm.xlu0 %1327, %v1033
      %v1329 = vpop.permute.xlu0 %1328
      %1332 = vset.pattern.permute.xlu0 0
      %1333 = vperm.xlu0 %1332, %v1035
      %v1334 = vpop.permute.xlu0 %1333
      %1337 = vset.pattern.permute.xlu0 0
      %1338 = vperm.xlu0 %1337, %v1037
      %v1339 = vpop.permute.xlu0 %1338
      %1342 = vset.pattern.permute.xlu0 0
      %1343 = vperm.xlu0 %1342, %v1039
      %v1344 = vpop.permute.xlu0 %1343
      %1347 = vset.pattern.permute.xlu0 0
      %1348 = vperm.xlu0 %1347, %v1041
      %v1349 = vpop.permute.xlu0 %1348
      %1352 = vset.pattern.permute.xlu0 0
      %1353 = vperm.xlu0 %1352, %v1043
      %v1354 = vpop.permute.xlu0 %1353
      %1357 = vset.pattern.permute.xlu0 0
      %1358 = vperm.xlu0 %1357, %v1045
      %v1359 = vpop.permute.xlu0 %1358
      %1362 = vset.pattern.permute.xlu0 0
      %1363 = vperm.xlu0 %1362, %v1047
      %v1364 = vpop.permute.xlu0 %1363
      %1367 = vset.pattern.permute.xlu0 0
      %1368 = vperm.xlu0 %1367, %v1049
      %v1369 = vpop.permute.xlu0 %1368
      %v1371 = vmul.f32 %v1294, %v1275
      %v1372 = vmul.f32 %v1299, %v1276
      %v1373 = vmul.f32 %v1304, %v1277
      %v1374 = vmul.f32 %v1309, %v1278
      %v1375 = vmul.f32 %v1314, %v1279
      %v1376 = vmul.f32 %v1319, %v1280
      %v1377 = vmul.f32 %v1324, %v1281
      %v1378 = vmul.f32 %v1329, %v1282
      %v1379 = vmul.f32 %v1334, %v1283
      %v1380 = vmul.f32 %v1339, %v1284
      %v1381 = vmul.f32 %v1344, %v1285
      %v1382 = vmul.f32 %v1349, %v1286
      %v1383 = vmul.f32 %v1354, %v1287
      %v1384 = vmul.f32 %v1359, %v1288
      %v1385 = vmul.f32 %v1364, %v1289
      %v1386 = vmul.f32 %v1369, %v1290
      %v1387 = vpack.c.bf16 %v1149, %v1147
      %v1388 = vpack.c.bf16 %v1153, %v1151
      %v1389 = vpack.c.bf16 %v1157, %v1155
      %v1390 = vpack.c.bf16 %v1161, %v1159
      %v1391 = vpack.c.bf16 %v1165, %v1163
      %v1392 = vpack.c.bf16 %v1169, %v1167
      %v1393 = vpack.c.bf16 %v1173, %v1171
      %v1394 = vpack.c.bf16 %v1177, %v1175
      %v1411 = vunpack.c.l.b16 %v701
      %v1412 = vunpack.c.l.b16 %v702
      %v1413 = vunpack.c.l.b16 %v703
      %v1414 = vunpack.c.l.b16 %v704
      %v1415 = vunpack.c.l.b16 %v705
      %v1416 = vunpack.c.l.b16 %v706
      %v1417 = vunpack.c.l.b16 %v707
      %v1418 = vunpack.c.l.b16 %v708
      %v1419 = vunpack.c.l.b16 %v709
      %v1420 = vunpack.c.l.b16 %v710
      %v1421 = vunpack.c.l.b16 %v711
      %v1422 = vunpack.c.l.b16 %v712
      %v1423 = vunpack.c.l.b16 %v713
      %v1424 = vunpack.c.l.b16 %v714
      %v1425 = vunpack.c.l.b16 %v715
      %v1426 = vunpack.c.l.b16 %v716
      %v1427 = vpack.c.b16 %v1412, %v1411
      %v1428 = vpack.c.b16 %v1414, %v1413
      %v1429 = vpack.c.b16 %v1416, %v1415
      %v1430 = vpack.c.b16 %v1418, %v1417
      %v1431 = vpack.c.b16 %v1420, %v1419
      %v1432 = vpack.c.b16 %v1422, %v1421
      %v1433 = vpack.c.b16 %v1424, %v1423
      %v1434 = vpack.c.b16 %v1426, %v1425
      %1443 = vmatprep.subr.bf16.mxu0 0
      %1444 = vmatpush1.bf16.msra.mxu0 %v1427
      %1445 = vmatprep.subr.bf16.mxu0 0
      %1446 = vmatpush1.bf16.msra.mxu0 %v1428
      %1447 = vmatprep.subr.bf16.mxu0 0
      %1448 = vmatpush1.bf16.msra.mxu0 %v1429
      %1449 = vmatprep.subr.bf16.mxu0 0
      %1450 = vmatpush1.bf16.msra.mxu0 %v1430
      %1451 = vmatprep.subr.bf16.mxu0 0
      %1452 = vmatpush1.bf16.msra.mxu0 %v1431
      %1453 = vmatprep.subr.bf16.mxu0 0
      %1454 = vmatpush1.bf16.msra.mxu0 %v1432
      %1455 = vmatprep.subr.bf16.mxu0 0
      %1456 = vmatpush1.bf16.msra.mxu0 %v1433
      %1457 = vmatprep.subr.bf16.mxu0 0
      %1458 = vmatpush1.bf16.msra.mxu0 %v1434
      %1459 = vmatprep.subr.bf16.mxu0 0
      %1460 = vmatpush1.bf16.msra.mxu0 0
      %1461 = vmatprep.subr.bf16.mxu0 0
      %1462 = vmatpush1.bf16.msra.mxu0 0
      %1463 = vmatprep.subr.bf16.mxu0 0
      %1464 = vmatpush1.bf16.msra.mxu0 0
      %1465 = vmatprep.subr.bf16.mxu0 0
      %1466 = vmatpush1.bf16.msra.mxu0 0
      %1467 = vmatprep.subr.bf16.mxu0 0
      %1468 = vmatpush1.bf16.msra.mxu0 0
      %1469 = vmatprep.subr.bf16.mxu0 0
      %1470 = vmatpush1.bf16.msra.mxu0 0
      %1471 = vmatprep.subr.bf16.mxu0 0
      %1472 = vmatpush1.bf16.msra.mxu0 0
      %1473 = vmatprep.subr.bf16.mxu0 0
      %1474 = vmatpush1.bf16.msra.mxu0 0
      %1475 = vmatprep.mubr.bf16.mxu0 0
      %1476 = vmatmul.mubr.bf16.gmra.mrb[0].mxu0 %v1387
      %v1477 = vpop.f32.mrb[0].mxu0
      %v1478 = vadd.f32 0.0, %v1477
      %v1479 = vpop.f32.mrb[0].mxu0
      %v1480 = vpop.f32.mrb[0].mxu0
      %v1481 = vadd.f32 0.0, %v1480
      %v1482 = vpop.f32.mrb[0].mxu0
      %1483 = vmatprep.mubr.bf16.mxu0 0
      %1484 = vmatmul.mubr.bf16.gmra.mrb[0].mxu0 %v1388
      %v1485 = vpop.f32.mrb[0].mxu0
      %v1486 = vadd.f32 0.0, %v1485
      %v1487 = vpop.f32.mrb[0].mxu0
      %v1488 = vpop.f32.mrb[0].mxu0
      %v1489 = vadd.f32 0.0, %v1488
      %v1490 = vpop.f32.mrb[0].mxu0
      %1491 = vmatprep.mubr.bf16.mxu0 0
      %1492 = vmatmul.mubr.bf16.gmra.mrb[0].mxu0 %v1389
      %v1493 = vpop.f32.mrb[0].mxu0
      %v1494 = vadd.f32 0.0, %v1493
      %v1495 = vpop.f32.mrb[0].mxu0
      %v1496 = vpop.f32.mrb[0].mxu0
      %v1497 = vadd.f32 0.0, %v1496
      %v1498 = vpop.f32.mrb[0].mxu0
      %1499 = vmatprep.mubr.bf16.mxu0 0
      %1500 = vmatmul.mubr.bf16.gmra.mrb[0].mxu0 %v1390
      %v1501 = vpop.f32.mrb[0].mxu0
      %v1502 = vadd.f32 0.0, %v1501
      %v1503 = vpop.f32.mrb[0].mxu0
      %v1504 = vpop.f32.mrb[0].mxu0
      %v1505 = vadd.f32 0.0, %v1504
      %v1506 = vpop.f32.mrb[0].mxu0
      %1507 = vmatprep.mubr.bf16.mxu0 0
      %1508 = vmatmul.mubr.bf16.gmra.mrb[0].mxu0 %v1391
      %v1509 = vpop.f32.mrb[0].mxu0
      %v1510 = vadd.f32 0.0, %v1509
      %v1511 = vpop.f32.mrb[0].mxu0
      %v1512 = vpop.f32.mrb[0].mxu0
      %v1513 = vadd.f32 0.0, %v1512
      %v1514 = vpop.f32.mrb[0].mxu0
      %1515 = vmatprep.mubr.bf16.mxu0 0
      %1516 = vmatmul.mubr.bf16.gmra.mrb[0].mxu0 %v1392
      %v1517 = vpop.f32.mrb[0].mxu0
      %v1518 = vadd.f32 0.0, %v1517
      %v1519 = vpop.f32.mrb[0].mxu0
      %v1520 = vpop.f32.mrb[0].mxu0
      %v1521 = vadd.f32 0.0, %v1520
      %v1522 = vpop.f32.mrb[0].mxu0
      %1523 = vmatprep.mubr.bf16.mxu0 0
      %1524 = vmatmul.mubr.bf16.gmra.mrb[0].mxu0 %v1393
      %v1525 = vpop.f32.mrb[0].mxu0
      %v1526 = vadd.f32 0.0, %v1525
      %v1527 = vpop.f32.mrb[0].mxu0
      %v1528 = vpop.f32.mrb[0].mxu0
      %v1529 = vadd.f32 0.0, %v1528
      %v1530 = vpop.f32.mrb[0].mxu0
      %1531 = vmatprep.mubr.bf16.mxu0 0
      %1532 = vmatmul.mubr.bf16.gmra.mrb[0].mxu0 %v1394
      %v1533 = vpop.f32.mrb[0].mxu0
      %v1534 = vadd.f32 0.0, %v1533
      %v1535 = vpop.f32.mrb[0].mxu0
      %v1536 = vpop.f32.mrb[0].mxu0
      %v1537 = vadd.f32 0.0, %v1536
      %v1538 = vpop.f32.mrb[0].mxu0
      %1539 = vdwg.mxu0
      %v1540 = vadd.f32 %v1371, %v1478
      %v1541 = vadd.f32 %v1372, %v1481
      %v1542 = vadd.f32 %v1373, %v1486
      %v1543 = vadd.f32 %v1374, %v1489
      %v1544 = vadd.f32 %v1375, %v1494
      %v1545 = vadd.f32 %v1376, %v1497
      %v1546 = vadd.f32 %v1377, %v1502
      %v1547 = vadd.f32 %v1378, %v1505
      %v1548 = vadd.f32 %v1379, %v1510
      %v1549 = vadd.f32 %v1380, %v1513
      %v1550 = vadd.f32 %v1381, %v1518
      %v1551 = vadd.f32 %v1382, %v1521
      %v1552 = vadd.f32 %v1383, %v1526
      %v1553 = vadd.f32 %v1384, %v1529
      %v1554 = vadd.f32 %v1385, %v1534
      %v1555 = vadd.f32 %v1386, %v1537
      %1556 = vst [vmem:[#allocation5] sm:$0xff] %v1540
      %1557 = vst [vmem:[#allocation5 + $0x8] sm:$0xff] %v1541
      %1558 = vst [vmem:[#allocation5 + $0x10] sm:$0xff] %v1542
      %1559 = vst [vmem:[#allocation5 + $0x18] sm:$0xff] %v1543
      %1560 = vst [vmem:[#allocation5 + $0x20] sm:$0xff] %v1544
      %1561 = vst [vmem:[#allocation5 + $0x28] sm:$0xff] %v1545
      %1562 = vst [vmem:[#allocation5 + $0x30] sm:$0xff] %v1546
      %1563 = vst [vmem:[#allocation5 + $0x38] sm:$0xff] %v1547
      %1564 = vst [vmem:[#allocation5 + $0x40] sm:$0xff] %v1548
      %1565 = vst [vmem:[#allocation5 + $0x48] sm:$0xff] %v1549
      %1566 = vst [vmem:[#allocation5 + $0x50] sm:$0xff] %v1550
      %1567 = vst [vmem:[#allocation5 + $0x58] sm:$0xff] %v1551
      %1568 = vst [vmem:[#allocation5 + $0x60] sm:$0xff] %v1552
      %1569 = vst [vmem:[#allocation5 + $0x68] sm:$0xff] %v1553
      %1570 = vst [vmem:[#allocation5 + $0x70] sm:$0xff] %v1554
      %1571 = vst [vmem:[#allocation5 + $0x78] sm:$0xff] %v1555
      %1572 = vst.msk [vmem:[#allocation3] sm:$0xff] %vm1258, %v986
      %1573 = vst.msk [vmem:[#allocation3 + $0x8] sm:$0xff] %vm1258, %v987
      %1574 = vst.msk [vmem:[#allocation3 + $0x10] sm:$0xff] %vm1258, %v988
      %1575 = vst.msk [vmem:[#allocation3 + $0x18] sm:$0xff] %vm1258, %v989
      %1576 = vst.msk [vmem:[#allocation3 + $0x20] sm:$0xff] %vm1258, %v990
      %1577 = vst.msk [vmem:[#allocation3 + $0x28] sm:$0xff] %vm1258, %v991
      %1578 = vst.msk [vmem:[#allocation3 + $0x30] sm:$0xff] %vm1258, %v992
      %1579 = vst.msk [vmem:[#allocation3 + $0x38] sm:$0xff] %vm1258, %v993
      %1580 = vst.msk [vmem:[#allocation3 + $0x40] sm:$0xff] %vm1258, %v994
      %1581 = vst.msk [vmem:[#allocation3 + $0x48] sm:$0xff] %vm1258, %v995
      %1582 = vst.msk [vmem:[#allocation3 + $0x50] sm:$0xff] %vm1258, %v996
      %1583 = vst.msk [vmem:[#allocation3 + $0x58] sm:$0xff] %vm1258, %v997
      %1584 = vst.msk [vmem:[#allocation3 + $0x60] sm:$0xff] %vm1258, %v998
      %1585 = vst.msk [vmem:[#allocation3 + $0x68] sm:$0xff] %vm1258, %v999
      %1586 = vst.msk [vmem:[#allocation3 + $0x70] sm:$0xff] %vm1258, %v1000
      %1587 = vst.msk [vmem:[#allocation3 + $0x78] sm:$0xff] %vm1258, %v1001
      // Predicated region
      $region45: #{attention_layer.3} parent=39 // pred_check
        %p1588 = pneg %p391
      $region46: #{attention_layer.3} parent=39 // pred_check_branch
        %1590 = sbr.rel (%p1588) target = $region48
      $region47: #{attention_layer.3} parent=39 // pred_region
        %v1591 = vld [vmem:[#allocation4] sm:$0xff]
        %v1592 = vld [vmem:[#allocation4 + $0x8] sm:$0xff]
        %v1593 = vld [vmem:[#allocation4 + $0x10] sm:$0xff]
        %v1594 = vld [vmem:[#allocation4 + $0x18] sm:$0xff]
        %v1595 = vld [vmem:[#allocation4 + $0x20] sm:$0xff]
        %v1596 = vld [vmem:[#allocation4 + $0x28] sm:$0xff]
        %v1597 = vld [vmem:[#allocation4 + $0x30] sm:$0xff]
        %v1598 = vld [vmem:[#allocation4 + $0x38] sm:$0xff]
        %v1599 = vld [vmem:[#allocation4 + $0x40] sm:$0xff]
        %v1600 = vld [vmem:[#allocation4 + $0x48] sm:$0xff]
        %v1601 = vld [vmem:[#allocation4 + $0x50] sm:$0xff]
        %v1602 = vld [vmem:[#allocation4 + $0x58] sm:$0xff]
        %v1603 = vld [vmem:[#allocation4 + $0x60] sm:$0xff]
        %v1604 = vld [vmem:[#allocation4 + $0x68] sm:$0xff]
        %v1605 = vld [vmem:[#allocation4 + $0x70] sm:$0xff]
        %v1606 = vld [vmem:[#allocation4 + $0x78] sm:$0xff]
        %v1607 = vrcp.pop %v1591
        %v1608 = vrcp.pop %v1592
        %v1609 = vrcp.pop %v1593
        %v1610 = vrcp.pop %v1594
        %v1611 = vrcp.pop %v1595
        %v1612 = vrcp.pop %v1596
        %v1613 = vrcp.pop %v1597
        %v1614 = vrcp.pop %v1598
        %v1615 = vrcp.pop %v1599
        %v1616 = vrcp.pop %v1600
        %v1617 = vrcp.pop %v1601
        %v1618 = vrcp.pop %v1602
        %v1619 = vrcp.pop %v1603
        %v1620 = vrcp.pop %v1604
        %v1621 = vrcp.pop %v1605
        %v1622 = vrcp.pop %v1606
        %v1623 = vld [vmem:[#allocation5] sm:$0xff]
        %v1624 = vld [vmem:[#allocation5 + $0x8] sm:$0xff]
        %v1625 = vld [vmem:[#allocation5 + $0x10] sm:$0xff]
        %v1626 = vld [vmem:[#allocation5 + $0x18] sm:$0xff]
        %v1627 = vld [vmem:[#allocation5 + $0x20] sm:$0xff]
        %v1628 = vld [vmem:[#allocation5 + $0x28] sm:$0xff]
        %v1629 = vld [vmem:[#allocation5 + $0x30] sm:$0xff]
        %v1630 = vld [vmem:[#allocation5 + $0x38] sm:$0xff]
        %v1631 = vld [vmem:[#allocation5 + $0x40] sm:$0xff]
        %v1632 = vld [vmem:[#allocation5 + $0x48] sm:$0xff]
        %v1633 = vld [vmem:[#allocation5 + $0x50] sm:$0xff]
        %v1634 = vld [vmem:[#allocation5 + $0x58] sm:$0xff]
        %v1635 = vld [vmem:[#allocation5 + $0x60] sm:$0xff]
        %v1636 = vld [vmem:[#allocation5 + $0x68] sm:$0xff]
        %v1637 = vld [vmem:[#allocation5 + $0x70] sm:$0xff]
        %v1638 = vld [vmem:[#allocation5 + $0x78] sm:$0xff]
        %1640 = vset.pattern.permute.xlu0 0
        %1641 = vperm.xlu0 %1640, %v1607
        %v1642 = vpop.permute.xlu0 %1641
        %1645 = vset.pattern.permute.xlu0 0
        %1646 = vperm.xlu0 %1645, %v1608
        %v1647 = vpop.permute.xlu0 %1646
        %1650 = vset.pattern.permute.xlu0 0
        %1651 = vperm.xlu0 %1650, %v1609
        %v1652 = vpop.permute.xlu0 %1651
        %1655 = vset.pattern.permute.xlu0 0
        %1656 = vperm.xlu0 %1655, %v1610
        %v1657 = vpop.permute.xlu0 %1656
        %1660 = vset.pattern.permute.xlu0 0
        %1661 = vperm.xlu0 %1660, %v1611
        %v1662 = vpop.permute.xlu0 %1661
        %1665 = vset.pattern.permute.xlu0 0
        %1666 = vperm.xlu0 %1665, %v1612
        %v1667 = vpop.permute.xlu0 %1666
        %1670 = vset.pattern.permute.xlu0 0
        %1671 = vperm.xlu0 %1670, %v1613
        %v1672 = vpop.permute.xlu0 %1671
        %1675 = vset.pattern.permute.xlu0 0
        %1676 = vperm.xlu0 %1675, %v1614
        %v1677 = vpop.permute.xlu0 %1676
        %1680 = vset.pattern.permute.xlu0 0
        %1681 = vperm.xlu0 %1680, %v1615
        %v1682 = vpop.permute.xlu0 %1681
        %1685 = vset.pattern.permute.xlu0 0
        %1686 = vperm.xlu0 %1685, %v1616
        %v1687 = vpop.permute.xlu0 %1686
        %1690 = vset.pattern.permute.xlu0 0
        %1691 = vperm.xlu0 %1690, %v1617
        %v1692 = vpop.permute.xlu0 %1691
        %1695 = vset.pattern.permute.xlu0 0
        %1696 = vperm.xlu0 %1695, %v1618
        %v1697 = vpop.permute.xlu0 %1696
        %1700 = vset.pattern.permute.xlu0 0
        %1701 = vperm.xlu0 %1700, %v1619
        %v1702 = vpop.permute.xlu0 %1701
        %1705 = vset.pattern.permute.xlu0 0
        %1706 = vperm.xlu0 %1705, %v1620
        %v1707 = vpop.permute.xlu0 %1706
        %1710 = vset.pattern.permute.xlu0 0
        %1711 = vperm.xlu0 %1710, %v1621
        %v1712 = vpop.permute.xlu0 %1711
        %1715 = vset.pattern.permute.xlu0 0
        %1716 = vperm.xlu0 %1715, %v1622
        %v1717 = vpop.permute.xlu0 %1716
        %v1719 = vmul.f32 %v1623, %v1642
        %v1720 = vmul.f32 %v1624, %v1647
        %v1721 = vmul.f32 %v1625, %v1652
        %v1722 = vmul.f32 %v1626, %v1657
        %v1723 = vmul.f32 %v1627, %v1662
        %v1724 = vmul.f32 %v1628, %v1667
        %v1725 = vmul.f32 %v1629, %v1672
        %v1726 = vmul.f32 %v1630, %v1677
        %v1727 = vmul.f32 %v1631, %v1682
        %v1728 = vmul.f32 %v1632, %v1687
        %v1729 = vmul.f32 %v1633, %v1692
        %v1730 = vmul.f32 %v1634, %v1697
        %v1731 = vmul.f32 %v1635, %v1702
        %v1732 = vmul.f32 %v1636, %v1707
        %v1733 = vmul.f32 %v1637, %v1712
        %v1734 = vmul.f32 %v1638, %v1717
        %1735 = vst [vmem:[%s388] sm:$0xff] %v1719
        %1736 = vst [vmem:[%s388 + $0x8] sm:$0xff] %v1720
        %1737 = vst [vmem:[%s388 + $0x10] sm:$0xff] %v1721
        %1738 = vst [vmem:[%s388 + $0x18] sm:$0xff] %v1722
        %1739 = vst [vmem:[%s388 + $0x20] sm:$0xff] %v1723
        %1740 = vst [vmem:[%s388 + $0x28] sm:$0xff] %v1724
        %1741 = vst [vmem:[%s388 + $0x30] sm:$0xff] %v1725
        %1742 = vst [vmem:[%s388 + $0x38] sm:$0xff] %v1726
        %1743 = vst [vmem:[%s388 + $0x40] sm:$0xff] %v1727
        %1744 = vst [vmem:[%s388 + $0x48] sm:$0xff] %v1728
        %1745 = vst [vmem:[%s388 + $0x50] sm:$0xff] %v1729
        %1746 = vst [vmem:[%s388 + $0x58] sm:$0xff] %v1730
        %1747 = vst [vmem:[%s388 + $0x60] sm:$0xff] %v1731
        %1748 = vst [vmem:[%s388 + $0x68] sm:$0xff] %v1732
        %1749 = vst [vmem:[%s388 + $0x70] sm:$0xff] %v1733
        %1750 = vst [vmem:[%s388 + $0x78] sm:$0xff] %v1734
      $region48: #{attention_layer.3} parent=39 // pred_fallthru
        _
      %s1751 = smul.u32 16, %s22
      %p1752 = scmp.lt.s32.totalorder %s21, 1
      %s1753 = scalar_select %p1752, %s21, 1
      %p1754 = scmp.lt.s32.totalorder %s1751, 15
      %s1755 = scalar_select %p1754, %s1751, 15
      %s1756 = smul.addr %s1753, 16
      %s1757 = sadd.s32 %s1755, %s1756
      %s1758 = smul.addr %s1757, 8
      %s1759 = scalar_lea.vmem %s5, %s1758
      // Predicated region
      $region49: #{attention_layer.3} parent=39 // pred_check
        %p1760 = pneg %p190
      $region50: #{attention_layer.3} parent=39 // pred_check_branch
        %1762 = sbr.rel (%p1760) target = $region52
      $region51: #{attention_layer.3} parent=39 // pred_region
        %s1763 = smul.u32 16, %s22
      $region52: #{attention_layer.3} parent=39 // pred_fallthru
        _
    $region40: #{attention_layer.3} parent=5 // pred_fallthru
      _
    %p1764 = scmp.le.s32.totalorder 2, %s11
    // Predicated region
    $region53: #{attention_layer.3} parent=5 // pred_check
      %p1765 = pneg %p1764
    $region54: #{attention_layer.3} parent=5 // pred_check_branch
      %1767 = sbr.rel (%p1765) target = $region56
    $region55: #{attention_layer.3} parent=5 // pred_region
      %s1768 = ssub.s32 %s11, 2
      // Predicated region
      $region57: #{attention_layer.3} parent=55 // pred_check
        %p1769 = pneg %p196
      $region58: #{attention_layer.3} parent=55 // pred_check_branch
        %1771 = sbr.rel (%p1769) target = $region60
      $region59: #{attention_layer.3} parent=55 // pred_region
        %s1772 = smul.u32 16, %s25
        %p1773 = scmp.lt.s32.totalorder %s24, 1
        %s1774 = scalar_select %p1773, %s24, 1
        %p1775 = scmp.lt.s32.totalorder %s1772, 15
        %s1776 = scalar_select %p1775, %s1772, 15
        %s1777 = smul.addr %s1774, 16
        %s1778 = sadd.s32 %s1776, %s1777
        %s1779 = smul.addr %s1778, 8
        %s1780 = scalar_lea.vmem %s5, %s1779
      $region60: #{attention_layer.3} parent=55 // pred_fallthru
        _
    $region56: #{attention_layer.3} parent=5 // pred_fallthru
      _
  $region6: #{attention_layer.3} parent=0 // loop_footer
    %s15 = sadd.s32 1, %s11
  $region7: #{attention_layer.3} parent=0 // loop_footer_branch
    %10 = sbr.rel target = $region3
  $region8: #{attention_layer.3} parent=0 // loop_exit
    _

</llo_original>
